<compile_context>
chip_gen: v7x
topology: tpu7x:2x2x1
jax: 0.10.0
libtpu: 0.0.40
codegen_flags: <defaults>
</compile_context>

<pallas_src>
import math
import numpy as np
import jax
import jax.numpy as jnp
from jax import lax
from jax.experimental import pallas as pl
from jax.experimental.pallas import tpu as pltpu


# ---------------------------------------------------------------------------
# Fused Pallas kernel: the whole StageBlock (all `depth` Blocks) for one batch
# tile.  Grid = (batch_tiles, depth); depth is the inner sequential axis and
# the activations live in a VMEM scratch across it.
# ---------------------------------------------------------------------------
def _make_stage_kernel(dim, num_heads, batch_tile, n_tokens, hidden,
                       hidden_chunk, matmul_dtype):
    head_dim = dim // num_heads
    inv_sqrt2 = 1.0 / math.sqrt(2.0)
    M = batch_tile * n_tokens                 # tokens per grid step
    n_hidden_chunks = hidden // hidden_chunk

    def mm(a, b):
        # MXU matmul with f32 accumulation; bf16 inputs at production dims.
        return jnp.dot(a.astype(matmul_dtype), b.astype(matmul_dtype),
                       preferred_element_type=jnp.float32)

    def kernel(x_ref, bias_ref,
               ln1w_ref, ln1b_ref, wqkv_ref, wproj_ref, bproj_ref,
               ln2w_ref, ln2b_ref, w1_ref, b1_ref, w2_ref, b2_ref,
               o_ref, xs_ref, attn_ref):
        d = pl.program_id(1)

        # First block of this batch tile: load activations into the resident
        # VMEM scratch (no HBM round trip until the last block).
        @pl.when(d == 0)
        def _():
            xs_ref[...] = x_ref[...].reshape(M, dim).astype(jnp.float32)

        x = xs_ref[...]                                           # (M, C) f32

        # ---- LayerNorm 1 (f32) ----
        mu = jnp.mean(x, axis=-1, keepdims=True)
        var = jnp.mean((x - mu) ** 2, axis=-1, keepdims=True)
        xn = ((x - mu) * lax.rsqrt(var + 1e-5) * ln1w_ref[0]
              + ln1b_ref[0]).astype(matmul_dtype)

        # ---- Attention ----
        # (the `x + randn*noise_strength_1` term is exactly 0: noise_strength_1
        #  is a zero-initialized parameter in the reference module)
        # Fused QKV matmul; attention scale is pre-folded into the Q columns.
        qkv = mm(xn, wqkv_ref[0]).astype(matmul_dtype)            # (M, 3C)

        # Per-head attention, batched over the batch-tile dimension with 3-D
        # einsums; head outputs go into column slices of a VMEM scratch.
        for h in range(num_heads):
            lo = h * head_dim
            qh = qkv[:, lo:lo + head_dim].reshape(batch_tile, n_tokens, head_dim)
            kh = qkv[:, dim + lo:dim + lo + head_dim].reshape(
                batch_tile, n_tokens, head_dim)
            vh = qkv[:, 2 * dim + lo:2 * dim + lo + head_dim].reshape(
                batch_tile, n_tokens, head_dim)
            s = jnp.einsum("bnd,bmd->bnm", qh, kh,
                           preferred_element_type=jnp.float32)
            s = s + bias_ref[0, h]                                # rel-pos bias
            s = s - jnp.max(s, axis=-1, keepdims=True)            # stable softmax
            e = jnp.exp(s)
            p = (e * pl.reciprocal(jnp.sum(e, axis=-1, keepdims=True),
                                   approx=True)).astype(matmul_dtype)
            ctx = jnp.einsum("bnm,bmd->bnd", p, vh,
                             preferred_element_type=jnp.float32)
            attn_ref[:, lo:lo + head_dim] = ctx.reshape(M, head_dim).astype(
                attn_ref.dtype)

        x = x + mm(attn_ref[...], wproj_ref[0]) + bproj_ref[0]

        # ---- LayerNorm 2 + MLP (hidden dim tiled to bound VMEM/live temps) ----
        mu2 = jnp.mean(x, axis=-1, keepdims=True)
        var2 = jnp.mean((x - mu2) ** 2, axis=-1, keepdims=True)
        xn2 = ((x - mu2) * lax.rsqrt(var2 + 1e-5) * ln2w_ref[0]
               + ln2b_ref[0]).astype(matmul_dtype)

        mlp = jnp.zeros((M, dim), jnp.float32)
        for c in range(n_hidden_chunks):
            clo = c * hidden_chunk
            h1 = mm(xn2, w1_ref[0][:, clo:clo + hidden_chunk]) \
                 + b1_ref[0][:, clo:clo + hidden_chunk]
            h1 = h1 * 0.5 * (1.0 + lax.erf(h1 * inv_sqrt2))       # exact erf-GELU
            mlp = mlp + mm(h1, w2_ref[0][clo:clo + hidden_chunk, :])
        x = x + mlp + b2_ref[0]

        xs_ref[...] = x                                           # stays resident

        # Last block: single writeback to HBM.
        @pl.when(d == pl.num_programs(1) - 1)
        def _():
            o_ref[...] = x.reshape(batch_tile, n_tokens, dim).astype(o_ref.dtype)

    return kernel


# ---------------------------------------------------------------------------
# Wrapper: tiling / VMEM budgeting / pallas_call
# ---------------------------------------------------------------------------
def _tpu_config():
    """(num_tensorcores_per_chip, physical VMEM bytes per TensorCore)."""
    try:
        kind = jax.devices()[0].device_kind.lower()
    except Exception:
        kind = ""
    if "v7" in kind:
        return 2, 64 * 1024 * 1024
    if "v5" in kind or "v6" in kind:
        return 1, 128 * 1024 * 1024
    return 1, 64 * 1024 * 1024        # conservative default for unknown parts


def _estimate_step_vmem(batch_tile, n_tokens, dim, hidden, hidden_chunk,
                        num_heads, w_itemsize, x_itemsize):
    """Rough per-grid-step VMEM working set (used to pick batch_tile / limit)."""
    M = batch_tile * n_tokens
    # double-buffered per-depth weight blocks streamed by the pipeline
    wbytes = 2 * w_itemsize * (3 * dim * dim + dim * dim
                               + dim * hidden + hidden * dim)
    wbytes += 2 * 4 * (num_heads * n_tokens * n_tokens + 4 * dim + hidden + dim)
    # double-buffered activation in/out blocks
    abytes = 2 * x_itemsize * M * dim * 2
    # resident scratch: f32 activations + head-merge buffer (matmul dtype)
    sbytes = 4 * M * dim + w_itemsize * M * dim
    # dominant live temporaries: xn/xn2/residual (f32), qkv (matmul dtype),
    # MLP chunk (f32), per-head score/prob tensors (f32)
    tbytes = (4 * M * dim * 3 + w_itemsize * M * 3 * dim
              + 4 * M * hidden_chunk * 2
              + 4 * 4 * batch_tile * n_tokens * n_tokens)
    return wbytes + abytes + sbytes + tbytes


def _pick_batch_tile(B, n_tokens, dim, hidden, hidden_chunk, num_heads,
                     w_itemsize, x_itemsize, vmem_budget, num_cores):
    """Largest divisor of B that fits the VMEM budget while keeping at least
    one batch tile per TensorCore (weights are re-streamed per batch tile, so
    fewer/larger tiles == less weight DMA and higher MXU occupancy)."""
    target_tiles = num_cores if B >= num_cores else 1
    best = 1
    for bt in range(1, B + 1):
        if B % bt:
            continue
        if B // bt < target_tiles:
            break
        if _estimate_step_vmem(bt, n_tokens, dim, hidden, hidden_chunk,
                               num_heads, w_itemsize, x_itemsize) <= vmem_budget:
            best = bt
    return best


def prepare_stage_weights(params, *, num_heads, window_size,
                          matmul_dtype=jnp.bfloat16):
    """One-time weight preparation (call once, NOT per forward step):
       * fold the attention scale head_dim**-0.5 into the Q columns of the
         fused (depth, C, 3C) QKV weight,
       * cast matmul weights to `matmul_dtype` (bf16 default -> MXU peak and
         half the weight DMA / VMEM), keep LN / bias vectors f32,
       * materialize the (depth, H, N, N) relative-position bias (gather=glue).
    """
    dim = params["w_qkv"].shape[1]
    head_dim = dim // num_heads
    scale = head_dim ** (-0.5)
    wqkv = jnp.concatenate([params["w_qkv"][:, :, :dim] * scale,
                            params["w_qkv"][:, :, dim:]], axis=-1)
    return {
        "bias":   make_rel_bias(params["rel_bias_table"], window_size, num_heads),
        "ln1_w":  params["ln1_w"],  "ln1_b": params["ln1_b"],
        "w_qkv":  wqkv.astype(matmul_dtype),
        "w_proj": params["w_proj"].astype(matmul_dtype),
        "b_proj": params["b_proj"],
        "ln2_w":  params["ln2_w"],  "ln2_b": params["ln2_b"],
        "w_fc1":  params["w_fc1"].astype(matmul_dtype),
        "b_fc1":  params["b_fc1"],
        "w_fc2":  params["w_fc2"].astype(matmul_dtype),
        "b_fc2":  params["b_fc2"],
    }


def stage_block_forward(x, weights, *, num_heads, batch_tile=None):
    """Fused StageBlock forward.  x: (B, N, C); weights from prepare_stage_weights."""
    B, N, C = x.shape
    depth = weights["w_qkv"].shape[0]
    hidden = weights["w_fc1"].shape[-1]
    matmul_dtype = weights["w_qkv"].dtype
    w_itemsize = jnp.dtype(matmul_dtype).itemsize

    # MLP hidden-dim chunking: bounds the live (M, chunk) GELU temporary
    # (matters most on v7x's 64 MiB VMEM at hidden ~ 4096).
    hidden_chunk = hidden
    for cand in (2048, 1024, 512):
        if hidden > cand and hidden % cand == 0:
            hidden_chunk = cand
            break

    num_cores, vmem_cap = _tpu_config()
    vmem_budget = int(vmem_cap * 0.82)

    if batch_tile is None:
        batch_tile = _pick_batch_tile(B, N, C, hidden, hidden_chunk, num_heads,
                                      w_itemsize, x.dtype.itemsize,
                                      vmem_budget, num_cores)
    assert B % batch_tile == 0
    num_tiles = B // batch_tile

    est_vmem = _estimate_step_vmem(batch_tile, N, C, hidden, hidden_chunk,
                                   num_heads, w_itemsize, x.dtype.itemsize)
    # Raise the scoped-VMEM limit only when the working set needs it (prod dims).
    vmem_limit = None
    if est_vmem > 24 * 1024 * 1024:
        vmem_limit = int(min(vmem_budget, max(est_vmem * 5 // 4, 48 * 1024 * 1024)))

    kernel = _make_stage_kernel(C, num_heads, batch_tile, N, hidden,
                                hidden_chunk, matmul_dtype)

    args = (x, weights["bias"],
            weights["ln1_w"], weights["ln1_b"], weights["w_qkv"],
            weights["w_proj"], weights["b_proj"],
            weights["ln2_w"], weights["ln2_b"],
            weights["w_fc1"], weights["b_fc1"],
            weights["w_fc2"], weights["b_fc2"])

    def weight_spec(a):
        # one depth-slice per grid step; indexed only by the depth grid axis
        nd = a.ndim
        return pl.BlockSpec((1,) + a.shape[1:],
                            lambda b, d, _nd=nd: (d,) + (0,) * (_nd - 1))

    in_specs = [pl.BlockSpec((batch_tile, N, C), lambda b, d: (b, 0, 0))] + \
               [weight_spec(a) for a in args[1:]]
    out_spec = pl.BlockSpec((batch_tile, N, C), lambda b, d: (b, 0, 0))

    # Advisory cost estimate for XLA scheduling around the custom call.
    flops = int(2 * depth * B * N * (4 * C * C + 2 * N * C + 2 * C * hidden))
    transcendentals = int(depth * B * N * (num_heads * N + hidden + 4))
    weight_bytes = sum(int(np.prod(a.shape)) * a.dtype.itemsize for a in args[1:])
    # weights are re-streamed once per batch tile
    bytes_accessed = int(2 * B * N * C * x.dtype.itemsize + weight_bytes * num_tiles)

    return pl.pallas_call(
        kernel,
        out_shape=jax.ShapeDtypeStruct((B, N, C), x.dtype),
        grid=(num_tiles, depth),
        in_specs=in_specs,
        out_specs=out_spec,
        scratch_shapes=[
            pltpu.VMEM((batch_tile * N, C), jnp.float32),    # resident activations
            pltpu.VMEM((batch_tile * N, C), matmul_dtype),   # head-merge buffer
        ],
        compiler_params=pltpu.CompilerParams(
            dimension_semantics=("parallel", "arbitrary"),
            vmem_limit_bytes=vmem_limit),
        cost_estimate=pl.CostEstimate(flops=flops,
                                      transcendentals=transcendentals,
                                      bytes_accessed=bytes_accessed),
    )(*args)


# ---------------------------------------------------------------------------
# Parameter init (deterministic, synthetic) + relative-position machinery
# ---------------------------------------------------------------------------
def init_stage_params(key, depth, dim, num_heads, hidden, window_size):
    ks = jax.random.split(key, 8)
    n_rel = (2 * window_size - 1) ** 2
    std = 0.02
    f32 = jnp.float32
    return {
        "ln1_w": jnp.ones((depth, 1, dim), f32),
        "ln1_b": jnp.zeros((depth, 1, dim), f32),
        # Linear weights stored pre-transposed: y = x @ W  (PyTorch is x @ W.T)
        "w_qkv": jax.random.normal(ks[0], (depth, dim, 3 * dim), f32) * std,
        "w_proj": jax.random.normal(ks[1], (depth, dim, dim), f32) * std,
        "b_proj": jax.random.normal(ks[2], (depth, 1, dim), f32) * std,
        "ln2_w": jnp.ones((depth, 1, dim), f32),
        "ln2_b": jnp.zeros((depth, 1, dim), f32),
        "w_fc1": jax.random.normal(ks[3], (depth, dim, hidden), f32) * std,
        "b_fc1": jax.random.normal(ks[4], (depth, 1, hidden), f32) * std,
        "w_fc2": jax.random.normal(ks[5], (depth, hidden, dim), f32) * std,
        "b_fc2": jax.random.normal(ks[6], (depth, 1, dim), f32) * std,
        "rel_bias_table": jax.random.normal(ks[7], (depth, n_rel, num_heads), f32) * std,
    }


def relative_position_index(window_size):
    coords = np.stack(np.meshgrid(np.arange(window_size), np.arange(window_size),
                                  indexing="ij"))                 # (2, W, W)
    flat = coords.reshape(2, -1)                                  # (2, W*W)
    rel = flat[:, :, None] - flat[:, None, :]                     # (2, N, N)
    rel = rel.transpose(1, 2, 0).astype(np.int64)                 # (N, N, 2)
    rel[:, :, 0] += window_size - 1
    rel[:, :, 1] += window_size - 1
    rel[:, :, 0] *= 2 * window_size - 1
    return rel.sum(-1)                                            # (N, N)


def make_rel_bias(table, window_size, num_heads):
    # table: (depth, (2W-1)^2, H)  ->  (depth, H, N, N)   (gather = glue, plain JAX)
    n = window_size * window_size
    idx = jnp.asarray(relative_position_index(window_size).reshape(-1))
    bias = table[:, idx, :].reshape(-1, n, n, num_heads)
    return jnp.transpose(bias, (0, 3, 1, 2))


# ---------------------------------------------------------------------------
# Pure-JAX reference (for a correctness sanity check)
# ---------------------------------------------------------------------------
def stage_reference(x, params, biases):
    def ln(x, w, b):
        mu = jnp.mean(x, axis=-1, keepdims=True)
        var = jnp.mean((x - mu) ** 2, axis=-1, keepdims=True)
        return (x - mu) * lax.rsqrt(var + 1e-5) * w + b

    depth, H = biases.shape[0], biases.shape[1]
    B, N, C = x.shape
    hd = C // H
    for d in range(depth):
        xn = ln(x, params["ln1_w"][d], params["ln1_b"][d])
        qkv = (xn @ params["w_qkv"][d]).reshape(B, N, 3, H, hd).transpose(2, 0, 3, 1, 4)
        q, k, v = qkv[0], qkv[1], qkv[2]
        a = jnp.einsum("bhnd,bhmd->bhnm", q, k) * (hd ** -0.5) + biases[d][None]
        a = jax.nn.softmax(a, axis=-1)
        attn = jnp.einsum("bhnm,bhmd->bhnd", a, v).transpose(0, 2, 1, 3).reshape(B, N, C)
        x = x + attn @ params["w_proj"][d] + params["b_proj"][d]
        xn2 = ln(x, params["ln2_w"][d], params["ln2_b"][d])
        h1 = xn2 @ params["w_fc1"][d] + params["b_fc1"][d]
        h1 = h1 * 0.5 * (1.0 + lax.erf(h1 / math.sqrt(2.0)))
        x = x + h1 @ params["w_fc2"][d] + params["b_fc2"][d]
    return x


# ---------------------------------------------------------------------------
if __name__ == "__main__":
    # Small-but-consistent config: N must equal window_size**2 for the bias shapes.
    depth, dim, num_heads, window_size = 2, 32, 4, 4
    mlp_ratio = 4.0
    hidden = int(dim * mlp_ratio)
    B, N = 2, window_size * window_size

    key = jax.random.PRNGKey(0)
    kx, kp = jax.random.split(key)
    x = jax.random.normal(kx, (B, N, dim), jnp.float32)

    params = init_stage_params(kp, depth, dim, num_heads, hidden, window_size)
    biases = make_rel_bias(params["rel_bias_table"], window_size, num_heads)
    ref = stage_reference(x, params, biases)

    # Production path: bf16 weights / MXU matmuls (looser tolerance — expected
    # mixed-precision deviation + approx-reciprocal softmax).
    w_bf16 = prepare_stage_weights(params, num_heads=num_heads,
                                   window_size=window_size,
                                   matmul_dtype=jnp.bfloat16)
    out_bf16 = jax.block_until_ready(
        stage_block_forward(x, w_bf16, num_heads=num_heads))
    np.testing.assert_allclose(np.asarray(out_bf16), np.asarray(ref),
                               rtol=2e-2, atol=2e-2)

    # Exactness check: f32 matmuls (tight tolerance).
    w_f32 = prepare_stage_weights(params, num_heads=num_heads,
                                  window_size=window_size,
                                  matmul_dtype=jnp.float32)
    out_f32 = jax.block_until_ready(
        stage_block_forward(x, w_f32, num_heads=num_heads))
    np.testing.assert_allclose(np.asarray(out_f32), np.asarray(ref),
                               rtol=5e-4, atol=5e-4)

    print("KERNEL_OK")
</pallas_src>

<mosaic_0001>
module attributes {stable_mosaic.version = 11 : i64} {
  func.func @kernel(%arg0: i32, %arg1: i32, %arg2: memref<2x16x32xf32, #tpu.memory_space<vmem>>, %arg3: memref<1x4x16x16xf32, #tpu.memory_space<vmem>>, %arg4: memref<1x1x32xf32, #tpu.memory_space<vmem>>, %arg5: memref<1x1x32xf32, #tpu.memory_space<vmem>>, %arg6: memref<1x32x96xbf16, #tpu.memory_space<vmem>>, %arg7: memref<1x32x32xbf16, #tpu.memory_space<vmem>>, %arg8: memref<1x1x32xf32, #tpu.memory_space<vmem>>, %arg9: memref<1x1x32xf32, #tpu.memory_space<vmem>>, %arg10: memref<1x1x32xf32, #tpu.memory_space<vmem>>, %arg11: memref<1x32x128xbf16, #tpu.memory_space<vmem>>, %arg12: memref<1x1x128xf32, #tpu.memory_space<vmem>>, %arg13: memref<1x128x32xbf16, #tpu.memory_space<vmem>>, %arg14: memref<1x1x32xf32, #tpu.memory_space<vmem>>, %arg15: memref<2x16x32xf32, #tpu.memory_space<vmem>>, %arg16: memref<32x32xf32, #tpu.memory_space<vmem>>, %arg17: memref<32x32xbf16, #tpu.memory_space<vmem>>) attributes {dimension_semantics = [#tpu.dimension_semantics<parallel>, #tpu.dimension_semantics<arbitrary>], iteration_bounds = array<i64: 1, 2>, scalar_prefetch = 0 : i64, scratch_operands = 2 : i64, tpu.core_type = #tpu.core_type<tc>, window_params = [{transform_indices = @transform_0, window_bounds = array<i64: 2, 16, 32>}, {transform_indices = @transform_1, window_bounds = array<i64: 1, 4, 16, 16>}, {transform_indices = @transform_2, window_bounds = array<i64: 1, 1, 32>}, {transform_indices = @transform_3, window_bounds = array<i64: 1, 1, 32>}, {transform_indices = @transform_4, window_bounds = array<i64: 1, 32, 96>}, {transform_indices = @transform_5, window_bounds = array<i64: 1, 32, 32>}, {transform_indices = @transform_6, window_bounds = array<i64: 1, 1, 32>}, {transform_indices = @transform_7, window_bounds = array<i64: 1, 1, 32>}, {transform_indices = @transform_8, window_bounds = array<i64: 1, 1, 32>}, {transform_indices = @transform_9, window_bounds = array<i64: 1, 32, 128>}, {transform_indices = @transform_10, window_bounds = array<i64: 1, 1, 128>}, {transform_indices = @transform_11, window_bounds = array<i64: 1, 128, 32>}, {transform_indices = @transform_12, window_bounds = array<i64: 1, 1, 32>}, {transform_indices = @transform_13, window_bounds = array<i64: 2, 16, 32>}]} {
    %c0_i32 = arith.constant 0 : i32
    %0 = arith.cmpi eq, %arg1, %c0_i32 : i32
    %1 = arith.extui %0 : i1 to i32
    %c0_i32_0 = arith.constant 0 : i32
    %2 = arith.cmpi ne, %1, %c0_i32_0 : i32
    scf.if %2 {
      %c0_91 = arith.constant 0 : index
      %c0_92 = arith.constant 0 : index
      %c0_93 = arith.constant 0 : index
      %209 = vector.load %arg2[%c0_91, %c0_92, %c0_93] : memref<2x16x32xf32, #tpu.memory_space<vmem>>, vector<2x16x32xf32>
      %210 = vector.shape_cast %209 : vector<2x16x32xf32> to vector<32x32xf32>
      %c0_94 = arith.constant 0 : index
      %c0_95 = arith.constant 0 : index
      %211 = vector.load %arg16[%c0_94, %c0_95] : memref<32x32xf32, #tpu.memory_space<vmem>>, vector<32x32xf32>
      tpu.vector_store %arg16[%c0_94, %c0_95], %210 {strides = array<i32>} : memref<32x32xf32, #tpu.memory_space<vmem>>, vector<32x32xf32>,
    } else {
    }
    %c0 = arith.constant 0 : index
    %c0_1 = arith.constant 0 : index
    %3 = vector.load %arg16[%c0, %c0_1] : memref<32x32xf32, #tpu.memory_space<vmem>>, vector<32x32xf32>
    %cst = arith.constant dense<0.000000e+00> : vector<32xf32>
    %4 = vector.multi_reduction <add>, %3, %cst [1] : vector<32x32xf32> to vector<32xf32>
    %5 = vector.shape_cast %4 : vector<32xf32> to vector<32x1xf32>
    %cst_2 = arith.constant 3.200000e+01 : f32
    %6 = vector.broadcast %cst_2 : f32 to vector<32x1xf32>
    %7 = arith.divf %5, %6 : vector<32x1xf32>
    %8 = vector.broadcast %7 : vector<32x1xf32> to vector<32x32xf32>
    %9 = arith.subf %3, %8 : vector<32x32xf32>
    %10 = arith.mulf %9, %9 : vector<32x32xf32>
    %cst_3 = arith.constant dense<0.000000e+00> : vector<32xf32>
    %11 = vector.multi_reduction <add>, %10, %cst_3 [1] : vector<32x32xf32> to vector<32xf32>
    %12 = vector.shape_cast %11 : vector<32xf32> to vector<32x1xf32>
    %cst_4 = arith.constant 3.200000e+01 : f32
    %13 = vector.broadcast %cst_4 : f32 to vector<32x1xf32>
    %14 = arith.divf %12, %13 : vector<32x1xf32>
    %15 = vector.broadcast %7 : vector<32x1xf32> to vector<32x32xf32>
    %16 = arith.subf %3, %15 : vector<32x32xf32>
    %cst_5 = arith.constant 9.99999974E-6 : f32
    %17 = vector.broadcast %cst_5 : f32 to vector<32x1xf32>
    %18 = arith.addf %14, %17 : vector<32x1xf32>
    %19 = math.rsqrt %18 : vector<32x1xf32>
    %20 = vector.broadcast %19 : vector<32x1xf32> to vector<32x32xf32>
    %21 = arith.mulf %16, %20 : vector<32x32xf32>
    %c0_6 = arith.constant 0 : index
    %c0_7 = arith.constant 0 : index
    %c0_8 = arith.constant 0 : index
    %22 = vector.load %arg4[%c0_6, %c0_7, %c0_8] : memref<1x1x32xf32, #tpu.memory_space<vmem>>, vector<1x1x32xf32>
    %23 = vector.shape_cast %22 : vector<1x1x32xf32> to vector<1x32xf32>
    %24 = vector.broadcast %23 : vector<1x32xf32> to vector<32x32xf32>
    %25 = arith.mulf %21, %24 : vector<32x32xf32>
    %c0_9 = arith.constant 0 : index
    %c0_10 = arith.constant 0 : index
    %c0_11 = arith.constant 0 : index
    %26 = vector.load %arg5[%c0_9, %c0_10, %c0_11] : memref<1x1x32xf32, #tpu.memory_space<vmem>>, vector<1x1x32xf32>
    %27 = vector.shape_cast %26 : vector<1x1x32xf32> to vector<1x32xf32>
    %28 = vector.broadcast %27 : vector<1x32xf32> to vector<32x32xf32>
    %29 = arith.addf %25, %28 : vector<32x32xf32>
    %30 = arith.truncf %29 : vector<32x32xf32> to vector<32x32xbf16>
    %c0_12 = arith.constant 0 : index
    %c0_13 = arith.constant 0 : index
    %c0_14 = arith.constant 0 : index
    %31 = vector.load %arg6[%c0_12, %c0_13, %c0_14] : memref<1x32x96xbf16, #tpu.memory_space<vmem>>, vector<1x32x96xbf16>
    %32 = vector.shape_cast %31 : vector<1x32x96xbf16> to vector<32x96xbf16>
    %cst_15 = arith.constant dense<0.000000e+00> : vector<32x96xf32>
    %33 = tpu.matmul %30, %32, %cst_15 {dimension_numbers = #tpu.dot_dimension_numbers<[1], [0], [0], [1], [0, 0, 1, 1], [], []>} : vector<32x32xbf16>, vector<32x96xbf16>, vector<32x96xf32> -> vector<32x96xf32>
    %34 = arith.truncf %33 : vector<32x96xf32> to vector<32x96xbf16>
    %35 = vector.extract_strided_slice %34 {offsets = [0, 0], sizes = [32, 8], strides = [1, 1]} : vector<32x96xbf16> to vector<32x8xbf16>
    %36 = vector.shape_cast %35 : vector<32x8xbf16> to vector<2x16x8xbf16>
    %37 = vector.extract_strided_slice %34 {offsets = [0, 32], sizes = [32, 8], strides = [1, 1]} : vector<32x96xbf16> to vector<32x8xbf16>
    %38 = vector.shape_cast %37 : vector<32x8xbf16> to vector<2x16x8xbf16>
    %39 = vector.extract_strided_slice %34 {offsets = [0, 64], sizes = [32, 8], strides = [1, 1]} : vector<32x96xbf16> to vector<32x8xbf16>
    %40 = vector.shape_cast %39 : vector<32x8xbf16> to vector<2x16x8xbf16>
    "tpu.trace_start"() <{level = 10 : i32, message = "bnd,bmd->bnm"}> : () -> ()
    %cst_16 = arith.constant dense<0.000000e+00> : vector<2x16x16xf32>
    %41 = tpu.matmul %36, %38, %cst_16 {dimension_numbers = #tpu.dot_dimension_numbers<[2], [2], [1], [1], [0, 0, 0, 1, 1, 1], [0], [0]>} : vector<2x16x8xbf16>, vector<2x16x8xbf16>, vector<2x16x16xf32> -> vector<2x16x16xf32>
    "tpu.trace_stop"() : () -> ()
    %c0_17 = arith.constant 0 : index
    %c0_18 = arith.constant 0 : index
    %c0_19 = arith.constant 0 : index
    %c0_20 = arith.constant 0 : index
    %42 = vector.load %arg3[%c0_17, %c0_18, %c0_19, %c0_20] : memref<1x4x16x16xf32, #tpu.memory_space<vmem>>, vector<1x1x16x16xf32>
    %43 = vector.shape_cast %42 : vector<1x1x16x16xf32> to vector<16x16xf32>
    %44 = vector.shape_cast %43 : vector<16x16xf32> to vector<1x16x16xf32>
    %45 = vector.broadcast %44 : vector<1x16x16xf32> to vector<2x16x16xf32>
    %46 = arith.addf %41, %45 : vector<2x16x16xf32>
    %cst_21 = arith.constant dense<0xFF800000> : vector<2x16xf32>
    %47 = vector.multi_reduction <maximumf>, %46, %cst_21 [2] : vector<2x16x16xf32> to vector<2x16xf32>
    %48 = vector.shape_cast %47 : vector<2x16xf32> to vector<2x16x1xf32>
    %49 = vector.broadcast %48 : vector<2x16x1xf32> to vector<2x16x16xf32>
    %50 = arith.subf %46, %49 : vector<2x16x16xf32>
    %51 = math.exp %50 : vector<2x16x16xf32>
    %cst_22 = arith.constant dense<0.000000e+00> : vector<2x16xf32>
    %52 = vector.multi_reduction <add>, %51, %cst_22 [2] : vector<2x16x16xf32> to vector<2x16xf32>
    %53 = vector.shape_cast %52 : vector<2x16xf32> to vector<2x16x1xf32>
    %54 = tpu.reciprocal %53 {approx = true} : vector<2x16x1xf32> -> vector<2x16x1xf32>
    %55 = vector.broadcast %54 : vector<2x16x1xf32> to vector<2x16x16xf32>
    %56 = arith.mulf %51, %55 : vector<2x16x16xf32>
    %57 = arith.truncf %56 : vector<2x16x16xf32> to vector<2x16x16xbf16>
    "tpu.trace_start"() <{level = 10 : i32, message = "bnm,bmd->bnd"}> : () -> ()
    %cst_23 = arith.constant dense<0.000000e+00> : vector<2x16x8xf32>
    %58 = tpu.matmul %57, %40, %cst_23 {dimension_numbers = #tpu.dot_dimension_numbers<[2], [1], [1], [2], [0, 0, 0, 1, 1, 2], [0], [0]>} : vector<2x16x16xbf16>, vector<2x16x8xbf16>, vector<2x16x8xf32> -> vector<2x16x8xf32>
    "tpu.trace_stop"() : () -> ()
    %59 = vector.shape_cast %58 : vector<2x16x8xf32> to vector<32x8xf32>
    %60 = arith.truncf %59 : vector<32x8xf32> to vector<32x8xbf16>
    %c0_24 = arith.constant 0 : index
    %c0_25 = arith.constant 0 : index
    %61 = vector.load %arg17[%c0_24, %c0_25] : memref<32x32xbf16, #tpu.memory_space<vmem>>, vector<32x8xbf16>
    tpu.vector_store %arg17[%c0_24, %c0_25], %60 {strides = array<i32>} : memref<32x32xbf16, #tpu.memory_space<vmem>>, vector<32x8xbf16>,
    %62 = vector.extract_strided_slice %34 {offsets = [0, 8], sizes = [32, 8], strides = [1, 1]} : vector<32x96xbf16> to vector<32x8xbf16>
    %63 = vector.shape_cast %62 : vector<32x8xbf16> to vector<2x16x8xbf16>
    %64 = vector.extract_strided_slice %34 {offsets = [0, 40], sizes = [32, 8], strides = [1, 1]} : vector<32x96xbf16> to vector<32x8xbf16>
    %65 = vector.shape_cast %64 : vector<32x8xbf16> to vector<2x16x8xbf16>
    %66 = vector.extract_strided_slice %34 {offsets = [0, 72], sizes = [32, 8], strides = [1, 1]} : vector<32x96xbf16> to vector<32x8xbf16>
    %67 = vector.shape_cast %66 : vector<32x8xbf16> to vector<2x16x8xbf16>
    "tpu.trace_start"() <{level = 10 : i32, message = "bnd,bmd->bnm"}> : () -> ()
    %cst_26 = arith.constant dense<0.000000e+00> : vector<2x16x16xf32>
    %68 = tpu.matmul %63, %65, %cst_26 {dimension_numbers = #tpu.dot_dimension_numbers<[2], [2], [1], [1], [0, 0, 0, 1, 1, 1], [0], [0]>} : vector<2x16x8xbf16>, vector<2x16x8xbf16>, vector<2x16x16xf32> -> vector<2x16x16xf32>
    "tpu.trace_stop"() : () -> ()
    %c0_27 = arith.constant 0 : index
    %c1 = arith.constant 1 : index
    %c0_28 = arith.constant 0 : index
    %c0_29 = arith.constant 0 : index
    %69 = vector.load %arg3[%c0_27, %c1, %c0_28, %c0_29] : memref<1x4x16x16xf32, #tpu.memory_space<vmem>>, vector<1x1x16x16xf32>
    %70 = vector.shape_cast %69 : vector<1x1x16x16xf32> to vector<16x16xf32>
    %71 = vector.shape_cast %70 : vector<16x16xf32> to vector<1x16x16xf32>
    %72 = vector.broadcast %71 : vector<1x16x16xf32> to vector<2x16x16xf32>
    %73 = arith.addf %68, %72 : vector<2x16x16xf32>
    %cst_30 = arith.constant dense<0xFF800000> : vector<2x16xf32>
    %74 = vector.multi_reduction <maximumf>, %73, %cst_30 [2] : vector<2x16x16xf32> to vector<2x16xf32>
    %75 = vector.shape_cast %74 : vector<2x16xf32> to vector<2x16x1xf32>
    %76 = vector.broadcast %75 : vector<2x16x1xf32> to vector<2x16x16xf32>
    %77 = arith.subf %73, %76 : vector<2x16x16xf32>
    %78 = math.exp %77 : vector<2x16x16xf32>
    %cst_31 = arith.constant dense<0.000000e+00> : vector<2x16xf32>
    %79 = vector.multi_reduction <add>, %78, %cst_31 [2] : vector<2x16x16xf32> to vector<2x16xf32>
    %80 = vector.shape_cast %79 : vector<2x16xf32> to vector<2x16x1xf32>
    %81 = tpu.reciprocal %80 {approx = true} : vector<2x16x1xf32> -> vector<2x16x1xf32>
    %82 = vector.broadcast %81 : vector<2x16x1xf32> to vector<2x16x16xf32>
    %83 = arith.mulf %78, %82 : vector<2x16x16xf32>
    %84 = arith.truncf %83 : vector<2x16x16xf32> to vector<2x16x16xbf16>
    "tpu.trace_start"() <{level = 10 : i32, message = "bnm,bmd->bnd"}> : () -> ()
    %cst_32 = arith.constant dense<0.000000e+00> : vector<2x16x8xf32>
    %85 = tpu.matmul %84, %67, %cst_32 {dimension_numbers = #tpu.dot_dimension_numbers<[2], [1], [1], [2], [0, 0, 0, 1, 1, 2], [0], [0]>} : vector<2x16x16xbf16>, vector<2x16x8xbf16>, vector<2x16x8xf32> -> vector<2x16x8xf32>
    "tpu.trace_stop"() : () -> ()
    %86 = vector.shape_cast %85 : vector<2x16x8xf32> to vector<32x8xf32>
    %87 = arith.truncf %86 : vector<32x8xf32> to vector<32x8xbf16>
    %c0_33 = arith.constant 0 : index
    %c8 = arith.constant 8 : index
    %88 = vector.load %arg17[%c0_33, %c8] : memref<32x32xbf16, #tpu.memory_space<vmem>>, vector<32x8xbf16>
    tpu.vector_store %arg17[%c0_33, %c8], %87 {strides = array<i32>} : memref<32x32xbf16, #tpu.memory_space<vmem>>, vector<32x8xbf16>,
    %89 = vector.extract_strided_slice %34 {offsets = [0, 16], sizes = [32, 8], strides = [1, 1]} : vector<32x96xbf16> to vector<32x8xbf16>
    %90 = vector.shape_cast %89 : vector<32x8xbf16> to vector<2x16x8xbf16>
    %91 = vector.extract_strided_slice %34 {offsets = [0, 48], sizes = [32, 8], strides = [1, 1]} : vector<32x96xbf16> to vector<32x8xbf16>
    %92 = vector.shape_cast %91 : vector<32x8xbf16> to vector<2x16x8xbf16>
    %93 = vector.extract_strided_slice %34 {offsets = [0, 80], sizes = [32, 8], strides = [1, 1]} : vector<32x96xbf16> to vector<32x8xbf16>
    %94 = vector.shape_cast %93 : vector<32x8xbf16> to vector<2x16x8xbf16>
    "tpu.trace_start"() <{level = 10 : i32, message = "bnd,bmd->bnm"}> : () -> ()
    %cst_34 = arith.constant dense<0.000000e+00> : vector<2x16x16xf32>
    %95 = tpu.matmul %90, %92, %cst_34 {dimension_numbers = #tpu.dot_dimension_numbers<[2], [2], [1], [1], [0, 0, 0, 1, 1, 1], [0], [0]>} : vector<2x16x8xbf16>, vector<2x16x8xbf16>, vector<2x16x16xf32> -> vector<2x16x16xf32>
    "tpu.trace_stop"() : () -> ()
    %c0_35 = arith.constant 0 : index
    %c2 = arith.constant 2 : index
    %c0_36 = arith.constant 0 : index
    %c0_37 = arith.constant 0 : index
    %96 = vector.load %arg3[%c0_35, %c2, %c0_36, %c0_37] : memref<1x4x16x16xf32, #tpu.memory_space<vmem>>, vector<1x1x16x16xf32>
    %97 = vector.shape_cast %96 : vector<1x1x16x16xf32> to vector<16x16xf32>
    %98 = vector.shape_cast %97 : vector<16x16xf32> to vector<1x16x16xf32>
    %99 = vector.broadcast %98 : vector<1x16x16xf32> to vector<2x16x16xf32>
    %100 = arith.addf %95, %99 : vector<2x16x16xf32>
    %cst_38 = arith.constant dense<0xFF800000> : vector<2x16xf32>
    %101 = vector.multi_reduction <maximumf>, %100, %cst_38 [2] : vector<2x16x16xf32> to vector<2x16xf32>
    %102 = vector.shape_cast %101 : vector<2x16xf32> to vector<2x16x1xf32>
    %103 = vector.broadcast %102 : vector<2x16x1xf32> to vector<2x16x16xf32>
    %104 = arith.subf %100, %103 : vector<2x16x16xf32>
    %105 = math.exp %104 : vector<2x16x16xf32>
    %cst_39 = arith.constant dense<0.000000e+00> : vector<2x16xf32>
    %106 = vector.multi_reduction <add>, %105, %cst_39 [2] : vector<2x16x16xf32> to vector<2x16xf32>
    %107 = vector.shape_cast %106 : vector<2x16xf32> to vector<2x16x1xf32>
    %108 = tpu.reciprocal %107 {approx = true} : vector<2x16x1xf32> -> vector<2x16x1xf32>
    %109 = vector.broadcast %108 : vector<2x16x1xf32> to vector<2x16x16xf32>
    %110 = arith.mulf %105, %109 : vector<2x16x16xf32>
    %111 = arith.truncf %110 : vector<2x16x16xf32> to vector<2x16x16xbf16>
    "tpu.trace_start"() <{level = 10 : i32, message = "bnm,bmd->bnd"}> : () -> ()
    %cst_40 = arith.constant dense<0.000000e+00> : vector<2x16x8xf32>
    %112 = tpu.matmul %111, %94, %cst_40 {dimension_numbers = #tpu.dot_dimension_numbers<[2], [1], [1], [2], [0, 0, 0, 1, 1, 2], [0], [0]>} : vector<2x16x16xbf16>, vector<2x16x8xbf16>, vector<2x16x8xf32> -> vector<2x16x8xf32>
    "tpu.trace_stop"() : () -> ()
    %113 = vector.shape_cast %112 : vector<2x16x8xf32> to vector<32x8xf32>
    %114 = arith.truncf %113 : vector<32x8xf32> to vector<32x8xbf16>
    %c0_41 = arith.constant 0 : index
    %c16 = arith.constant 16 : index
    %115 = vector.load %arg17[%c0_41, %c16] : memref<32x32xbf16, #tpu.memory_space<vmem>>, vector<32x8xbf16>
    tpu.vector_store %arg17[%c0_41, %c16], %114 {strides = array<i32>} : memref<32x32xbf16, #tpu.memory_space<vmem>>, vector<32x8xbf16>,
    %116 = vector.extract_strided_slice %34 {offsets = [0, 24], sizes = [32, 8], strides = [1, 1]} : vector<32x96xbf16> to vector<32x8xbf16>
    %117 = vector.shape_cast %116 : vector<32x8xbf16> to vector<2x16x8xbf16>
    %118 = vector.extract_strided_slice %34 {offsets = [0, 56], sizes = [32, 8], strides = [1, 1]} : vector<32x96xbf16> to vector<32x8xbf16>
    %119 = vector.shape_cast %118 : vector<32x8xbf16> to vector<2x16x8xbf16>
    %120 = vector.extract_strided_slice %34 {offsets = [0, 88], sizes = [32, 8], strides = [1, 1]} : vector<32x96xbf16> to vector<32x8xbf16>
    %121 = vector.shape_cast %120 : vector<32x8xbf16> to vector<2x16x8xbf16>
    "tpu.trace_start"() <{level = 10 : i32, message = "bnd,bmd->bnm"}> : () -> ()
    %cst_42 = arith.constant dense<0.000000e+00> : vector<2x16x16xf32>
    %122 = tpu.matmul %117, %119, %cst_42 {dimension_numbers = #tpu.dot_dimension_numbers<[2], [2], [1], [1], [0, 0, 0, 1, 1, 1], [0], [0]>} : vector<2x16x8xbf16>, vector<2x16x8xbf16>, vector<2x16x16xf32> -> vector<2x16x16xf32>
    "tpu.trace_stop"() : () -> ()
    %c0_43 = arith.constant 0 : index
    %c3 = arith.constant 3 : index
    %c0_44 = arith.constant 0 : index
    %c0_45 = arith.constant 0 : index
    %123 = vector.load %arg3[%c0_43, %c3, %c0_44, %c0_45] : memref<1x4x16x16xf32, #tpu.memory_space<vmem>>, vector<1x1x16x16xf32>
    %124 = vector.shape_cast %123 : vector<1x1x16x16xf32> to vector<16x16xf32>
    %125 = vector.shape_cast %124 : vector<16x16xf32> to vector<1x16x16xf32>
    %126 = vector.broadcast %125 : vector<1x16x16xf32> to vector<2x16x16xf32>
    %127 = arith.addf %122, %126 : vector<2x16x16xf32>
    %cst_46 = arith.constant dense<0xFF800000> : vector<2x16xf32>
    %128 = vector.multi_reduction <maximumf>, %127, %cst_46 [2] : vector<2x16x16xf32> to vector<2x16xf32>
    %129 = vector.shape_cast %128 : vector<2x16xf32> to vector<2x16x1xf32>
    %130 = vector.broadcast %129 : vector<2x16x1xf32> to vector<2x16x16xf32>
    %131 = arith.subf %127, %130 : vector<2x16x16xf32>
    %132 = math.exp %131 : vector<2x16x16xf32>
    %cst_47 = arith.constant dense<0.000000e+00> : vector<2x16xf32>
    %133 = vector.multi_reduction <add>, %132, %cst_47 [2] : vector<2x16x16xf32> to vector<2x16xf32>
    %134 = vector.shape_cast %133 : vector<2x16xf32> to vector<2x16x1xf32>
    %135 = tpu.reciprocal %134 {approx = true} : vector<2x16x1xf32> -> vector<2x16x1xf32>
    %136 = vector.broadcast %135 : vector<2x16x1xf32> to vector<2x16x16xf32>
    %137 = arith.mulf %132, %136 : vector<2x16x16xf32>
    %138 = arith.truncf %137 : vector<2x16x16xf32> to vector<2x16x16xbf16>
    "tpu.trace_start"() <{level = 10 : i32, message = "bnm,bmd->bnd"}> : () -> ()
    %cst_48 = arith.constant dense<0.000000e+00> : vector<2x16x8xf32>
    %139 = tpu.matmul %138, %121, %cst_48 {dimension_numbers = #tpu.dot_dimension_numbers<[2], [1], [1], [2], [0, 0, 0, 1, 1, 2], [0], [0]>} : vector<2x16x16xbf16>, vector<2x16x8xbf16>, vector<2x16x8xf32> -> vector<2x16x8xf32>
    "tpu.trace_stop"() : () -> ()
    %140 = vector.shape_cast %139 : vector<2x16x8xf32> to vector<32x8xf32>
    %141 = arith.truncf %140 : vector<32x8xf32> to vector<32x8xbf16>
    %c0_49 = arith.constant 0 : index
    %c24 = arith.constant 24 : index
    %142 = vector.load %arg17[%c0_49, %c24] : memref<32x32xbf16, #tpu.memory_space<vmem>>, vector<32x8xbf16>
    tpu.vector_store %arg17[%c0_49, %c24], %141 {strides = array<i32>} : memref<32x32xbf16, #tpu.memory_space<vmem>>, vector<32x8xbf16>,
    %c0_50 = arith.constant 0 : index
    %c0_51 = arith.constant 0 : index
    %143 = vector.load %arg17[%c0_50, %c0_51] : memref<32x32xbf16, #tpu.memory_space<vmem>>, vector<32x32xbf16>
    %c0_52 = arith.constant 0 : index
    %c0_53 = arith.constant 0 : index
    %c0_54 = arith.constant 0 : index
    %144 = vector.load %arg7[%c0_52, %c0_53, %c0_54] : memref<1x32x32xbf16, #tpu.memory_space<vmem>>, vector<1x32x32xbf16>
    %145 = vector.shape_cast %144 : vector<1x32x32xbf16> to vector<32x32xbf16>
    %cst_55 = arith.constant dense<0.000000e+00> : vector<32x32xf32>
    %146 = tpu.matmul %143, %145, %cst_55 {dimension_numbers = #tpu.dot_dimension_numbers<[1], [0], [0], [1], [0, 0, 1, 1], [], []>} : vector<32x32xbf16>, vector<32x32xbf16>, vector<32x32xf32> -> vector<32x32xf32>
    %147 = arith.addf %3, %146 : vector<32x32xf32>
    %c0_56 = arith.constant 0 : index
    %c0_57 = arith.constant 0 : index
    %c0_58 = arith.constant 0 : index
    %148 = vector.load %arg8[%c0_56, %c0_57, %c0_58] : memref<1x1x32xf32, #tpu.memory_space<vmem>>, vector<1x1x32xf32>
    %149 = vector.shape_cast %148 : vector<1x1x32xf32> to vector<1x32xf32>
    %150 = vector.broadcast %149 : vector<1x32xf32> to vector<32x32xf32>
    %151 = arith.addf %147, %150 : vector<32x32xf32>
    %cst_59 = arith.constant dense<0.000000e+00> : vector<32xf32>
    %152 = vector.multi_reduction <add>, %151, %cst_59 [1] : vector<32x32xf32> to vector<32xf32>
    %153 = vector.shape_cast %152 : vector<32xf32> to vector<32x1xf32>
    %cst_60 = arith.constant 3.200000e+01 : f32
    %154 = vector.broadcast %cst_60 : f32 to vector<32x1xf32>
    %155 = arith.divf %153, %154 : vector<32x1xf32>
    %156 = vector.broadcast %155 : vector<32x1xf32> to vector<32x32xf32>
    %157 = arith.subf %151, %156 : vector<32x32xf32>
    %158 = arith.mulf %157, %157 : vector<32x32xf32>
    %cst_61 = arith.constant dense<0.000000e+00> : vector<32xf32>
    %159 = vector.multi_reduction <add>, %158, %cst_61 [1] : vector<32x32xf32> to vector<32xf32>
    %160 = vector.shape_cast %159 : vector<32xf32> to vector<32x1xf32>
    %cst_62 = arith.constant 3.200000e+01 : f32
    %161 = vector.broadcast %cst_62 : f32 to vector<32x1xf32>
    %162 = arith.divf %160, %161 : vector<32x1xf32>
    %163 = vector.broadcast %155 : vector<32x1xf32> to vector<32x32xf32>
    %164 = arith.subf %151, %163 : vector<32x32xf32>
    %cst_63 = arith.constant 9.99999974E-6 : f32
    %165 = vector.broadcast %cst_63 : f32 to vector<32x1xf32>
    %166 = arith.addf %162, %165 : vector<32x1xf32>
    %167 = math.rsqrt %166 : vector<32x1xf32>
    %168 = vector.broadcast %167 : vector<32x1xf32> to vector<32x32xf32>
    %169 = arith.mulf %164, %168 : vector<32x32xf32>
    %c0_64 = arith.constant 0 : index
    %c0_65 = arith.constant 0 : index
    %c0_66 = arith.constant 0 : index
    %170 = vector.load %arg9[%c0_64, %c0_65, %c0_66] : memref<1x1x32xf32, #tpu.memory_space<vmem>>, vector<1x1x32xf32>
    %171 = vector.shape_cast %170 : vector<1x1x32xf32> to vector<1x32xf32>
    %172 = vector.broadcast %171 : vector<1x32xf32> to vector<32x32xf32>
    %173 = arith.mulf %169, %172 : vector<32x32xf32>
    %c0_67 = arith.constant 0 : index
    %c0_68 = arith.constant 0 : index
    %c0_69 = arith.constant 0 : index
    %174 = vector.load %arg10[%c0_67, %c0_68, %c0_69] : memref<1x1x32xf32, #tpu.memory_space<vmem>>, vector<1x1x32xf32>
    %175 = vector.shape_cast %174 : vector<1x1x32xf32> to vector<1x32xf32>
    %176 = vector.broadcast %175 : vector<1x32xf32> to vector<32x32xf32>
    %177 = arith.addf %173, %176 : vector<32x32xf32>
    %178 = arith.truncf %177 : vector<32x32xf32> to vector<32x32xbf16>
    %cst_70 = arith.constant 0.000000e+00 : f32
    %179 = vector.broadcast %cst_70 : f32 to vector<32x32xf32>
    %c0_71 = arith.constant 0 : index
    %c0_72 = arith.constant 0 : index
    %c0_73 = arith.constant 0 : index
    %180 = vector.load %arg11[%c0_71, %c0_72, %c0_73] : memref<1x32x128xbf16, #tpu.memory_space<vmem>>, vector<1x32x128xbf16>
    %181 = vector.shape_cast %180 : vector<1x32x128xbf16> to vector<32x128xbf16>
    %cst_74 = arith.constant dense<0.000000e+00> : vector<32x128xf32>
    %182 = tpu.matmul %178, %181, %cst_74 {dimension_numbers = #tpu.dot_dimension_numbers<[1], [0], [0], [1], [0, 0, 1, 1], [], []>} : vector<32x32xbf16>, vector<32x128xbf16>, vector<32x128xf32> -> vector<32x128xf32>
    %c0_75 = arith.constant 0 : index
    %c0_76 = arith.constant 0 : index
    %c0_77 = arith.constant 0 : index
    %183 = vector.load %arg12[%c0_75, %c0_76, %c0_77] : memref<1x1x128xf32, #tpu.memory_space<vmem>>, vector<1x1x128xf32>
    %184 = vector.shape_cast %183 : vector<1x1x128xf32> to vector<1x128xf32>
    %185 = vector.broadcast %184 : vector<1x128xf32> to vector<32x128xf32>
    %186 = arith.addf %182, %185 : vector<32x128xf32>
    %cst_78 = arith.constant 5.000000e-01 : f32
    %187 = vector.broadcast %cst_78 : f32 to vector<32x128xf32>
    %188 = arith.mulf %186, %187 : vector<32x128xf32>
    %cst_79 = arith.constant 0.707106769 : f32
    %189 = vector.broadcast %cst_79 : f32 to vector<32x128xf32>
    %190 = arith.mulf %186, %189 : vector<32x128xf32>
    %191 = math.erf %190 : vector<32x128xf32>
    %cst_80 = arith.constant 1.000000e+00 : f32
    %192 = vector.broadcast %cst_80 : f32 to vector<32x128xf32>
    %193 = arith.addf %192, %191 : vector<32x128xf32>
    %194 = arith.mulf %188, %193 : vector<32x128xf32>
    %c0_81 = arith.constant 0 : index
    %c0_82 = arith.constant 0 : index
    %c0_83 = arith.constant 0 : index
    %195 = vector.load %arg13[%c0_81, %c0_82, %c0_83] : memref<1x128x32xbf16, #tpu.memory_space<vmem>>, vector<1x128x32xbf16>
    %196 = vector.shape_cast %195 : vector<1x128x32xbf16> to vector<128x32xbf16>
    %197 = arith.truncf %194 : vector<32x128xf32> to vector<32x128xbf16>
    %cst_84 = arith.constant dense<0.000000e+00> : vector<32x32xf32>
    %198 = tpu.matmul %197, %196, %cst_84 {dimension_numbers = #tpu.dot_dimension_numbers<[1], [0], [0], [1], [0, 0, 1, 1], [], []>} : vector<32x128xbf16>, vector<128x32xbf16>, vector<32x32xf32> -> vector<32x32xf32>
    %199 = arith.addf %179, %198 : vector<32x32xf32>
    %200 = arith.addf %151, %199 : vector<32x32xf32>
    %c0_85 = arith.constant 0 : index
    %c0_86 = arith.constant 0 : index
    %c0_87 = arith.constant 0 : index
    %201 = vector.load %arg14[%c0_85, %c0_86, %c0_87] : memref<1x1x32xf32, #tpu.memory_space<vmem>>, vector<1x1x32xf32>
    %202 = vector.shape_cast %201 : vector<1x1x32xf32> to vector<1x32xf32>
    %203 = vector.broadcast %202 : vector<1x32xf32> to vector<32x32xf32>
    %204 = arith.addf %200, %203 : vector<32x32xf32>
    %c0_88 = arith.constant 0 : index
    %c0_89 = arith.constant 0 : index
    %205 = vector.load %arg16[%c0_88, %c0_89] : memref<32x32xf32, #tpu.memory_space<vmem>>, vector<32x32xf32>
    tpu.vector_store %arg16[%c0_88, %c0_89], %204 {strides = array<i32>} : memref<32x32xf32, #tpu.memory_space<vmem>>, vector<32x32xf32>,
    %c1_i32 = arith.constant 1 : i32
    %206 = arith.cmpi eq, %arg1, %c1_i32 : i32
    %207 = arith.extui %206 : i1 to i32
    %c0_i32_90 = arith.constant 0 : i32
    %208 = arith.cmpi ne, %207, %c0_i32_90 : i32
    scf.if %208 {
      %209 = vector.shape_cast %204 : vector<32x32xf32> to vector<2x16x32xf32>
      %c0_91 = arith.constant 0 : index
      %c0_92 = arith.constant 0 : index
      %c0_93 = arith.constant 0 : index
      %210 = vector.load %arg15[%c0_91, %c0_92, %c0_93] : memref<2x16x32xf32, #tpu.memory_space<vmem>>, vector<2x16x32xf32>
      tpu.vector_store %arg15[%c0_91, %c0_92, %c0_93], %209 {strides = array<i32>} : memref<2x16x32xf32, #tpu.memory_space<vmem>>, vector<2x16x32xf32>,
    } else {
    }
    return
  }
  func.func @transform_0(%arg0: i32, %arg1: i32) -> (i32, i32, i32) {
    %c0_i32 = arith.constant 0 : i32
    %c0_i32_0 = arith.constant 0 : i32
    %c0_i32_1 = arith.constant 0 : i32
    return %arg0, %c0_i32, %c0_i32_0 : i32, i32, i32
  }
  func.func @transform_1(%arg0: i32, %arg1: i32) -> (i32, i32, i32, i32) {
    %c0_i32 = arith.constant 0 : i32
    %c0_i32_0 = arith.constant 0 : i32
    %c0_i32_1 = arith.constant 0 : i32
    %c0_i32_2 = arith.constant 0 : i32
    return %arg1, %c0_i32, %c0_i32_0, %c0_i32_1 : i32, i32, i32, i32
  }
  func.func @transform_2(%arg0: i32, %arg1: i32) -> (i32, i32, i32) {
    %c0_i32 = arith.constant 0 : i32
    %c0_i32_0 = arith.constant 0 : i32
    %c0_i32_1 = arith.constant 0 : i32
    return %arg1, %c0_i32, %c0_i32_0 : i32, i32, i32
  }
  func.func @transform_3(%arg0: i32, %arg1: i32) -> (i32, i32, i32) {
    %c0_i32 = arith.constant 0 : i32
    %c0_i32_0 = arith.constant 0 : i32
    %c0_i32_1 = arith.constant 0 : i32
    return %arg1, %c0_i32, %c0_i32_0 : i32, i32, i32
  }
  func.func @transform_4(%arg0: i32, %arg1: i32) -> (i32, i32, i32) {
    %c0_i32 = arith.constant 0 : i32
    %c0_i32_0 = arith.constant 0 : i32
    %c0_i32_1 = arith.constant 0 : i32
    return %arg1, %c0_i32, %c0_i32_0 : i32, i32, i32
  }
  func.func @transform_5(%arg0: i32, %arg1: i32) -> (i32, i32, i32) {
    %c0_i32 = arith.constant 0 : i32
    %c0_i32_0 = arith.constant 0 : i32
    %c0_i32_1 = arith.constant 0 : i32
    return %arg1, %c0_i32, %c0_i32_0 : i32, i32, i32
  }
  func.func @transform_6(%arg0: i32, %arg1: i32) -> (i32, i32, i32) {
    %c0_i32 = arith.constant 0 : i32
    %c0_i32_0 = arith.constant 0 : i32
    %c0_i32_1 = arith.constant 0 : i32
    return %arg1, %c0_i32, %c0_i32_0 : i32, i32, i32
  }
  func.func @transform_7(%arg0: i32, %arg1: i32) -> (i32, i32, i32) {
    %c0_i32 = arith.constant 0 : i32
    %c0_i32_0 = arith.constant 0 : i32
    %c0_i32_1 = arith.constant 0 : i32
    return %arg1, %c0_i32, %c0_i32_0 : i32, i32, i32
  }
  func.func @transform_8(%arg0: i32, %arg1: i32) -> (i32, i32, i32) {
    %c0_i32 = arith.constant 0 : i32
    %c0_i32_0 = arith.constant 0 : i32
    %c0_i32_1 = arith.constant 0 : i32
    return %arg1, %c0_i32, %c0_i32_0 : i32, i32, i32
  }
  func.func @transform_9(%arg0: i32, %arg1: i32) -> (i32, i32, i32) {
    %c0_i32 = arith.constant 0 : i32
    %c0_i32_0 = arith.constant 0 : i32
    %c0_i32_1 = arith.constant 0 : i32
    return %arg1, %c0_i32, %c0_i32_0 : i32, i32, i32
  }
  func.func @transform_10(%arg0: i32, %arg1: i32) -> (i32, i32, i32) {
    %c0_i32 = arith.constant 0 : i32
    %c0_i32_0 = arith.constant 0 : i32
    %c0_i32_1 = arith.constant 0 : i32
    return %arg1, %c0_i32, %c0_i32_0 : i32, i32, i32
  }
  func.func @transform_11(%arg0: i32, %arg1: i32) -> (i32, i32, i32) {
    %c0_i32 = arith.constant 0 : i32
    %c0_i32_0 = arith.constant 0 : i32
    %c0_i32_1 = arith.constant 0 : i32
    return %arg1, %c0_i32, %c0_i32_0 : i32, i32, i32
  }
  func.func @transform_12(%arg0: i32, %arg1: i32) -> (i32, i32, i32) {
    %c0_i32 = arith.constant 0 : i32
    %c0_i32_0 = arith.constant 0 : i32
    %c0_i32_1 = arith.constant 0 : i32
    return %arg1, %c0_i32, %c0_i32_0 : i32, i32, i32
  }
  func.func @transform_13(%arg0: i32, %arg1: i32) -> (i32, i32, i32) {
    %c0_i32 = arith.constant 0 : i32
    %c0_i32_0 = arith.constant 0 : i32
    %c0_i32_1 = arith.constant 0 : i32
    return %arg0, %c0_i32, %c0_i32_0 : i32, i32, i32
  }
}

</mosaic_0001>

<llo_original>
// kernel: tpu_custom_call.1
$region0: #{tpu_custom_call.1}
  #allocation0 [shape = 'u32[]', space=smem, size = 0x4, offset = 0x4, fixed_abs, tag = 'smem constant byte address 0x4 - core index']
  #allocation1 [shape = 'u32[144,128]{1,0:T(1,128)}', space=vmem, size = 0x12000, scoped, tag = 'internal scratch']
  #allocation2 [shape = 'f32[32,32]{1,0:T(8,128)}', space=vmem, size = 0x4000, scoped, tag = 'scratch operand']
  #allocation3 [shape = 'bf16[32,32]{1,0:T(16,128)(2,1)}', space=vmem, size = 0x2000, scoped, tag = 'scratch operand']
  %s0 = inlined_call_operand.vmem [shape: f32[2,16,32], index: 0, kind: input, shape index: {}]
  %s1 = inlined_call_operand.vmem [shape: f32[2,4,16,16], index: 1, kind: input, shape index: {}]
  %s2 = inlined_call_operand.vmem [shape: f32[2,1,32], index: 2, kind: input, shape index: {}]
  %s3 = inlined_call_operand.vmem [shape: f32[2,1,32], index: 3, kind: input, shape index: {}]
  %s4 = inlined_call_operand.hbm [shape: bf16[2,32,96], index: 4, kind: input, shape index: {}]
  %s5 = inlined_call_operand.hbm [shape: bf16[2,32,32], index: 5, kind: input, shape index: {}]
  %s6 = inlined_call_operand.vmem [shape: f32[2,1,32], index: 6, kind: input, shape index: {}]
  %s7 = inlined_call_operand.vmem [shape: f32[2,1,32], index: 7, kind: input, shape index: {}]
  %s8 = inlined_call_operand.hbm [shape: f32[2,1,32], index: 8, kind: input, shape index: {}]
  %s9 = inlined_call_operand.hbm [shape: bf16[2,32,128], index: 9, kind: input, shape index: {}]
  %s10 = inlined_call_operand.hbm [shape: f32[2,1,128], index: 10, kind: input, shape index: {}]
  %s11 = inlined_call_operand.vmem [shape: bf16[2,128,32], index: 11, kind: input, shape index: {}]
  %s12 = inlined_call_operand.vmem [shape: f32[2,1,32], index: 12, kind: input, shape index: {}]
  %s13 = inlined_call_operand.hbm [shape: f32[2,16,32], index: 13, kind: output, shape index: {}]
  %s14 = sld [smem:[#allocation0]]
  $region113: #{tpu_custom_call.1} parent=0
    _
  %s16 = ssub.s32 1, %s14
  %s17 = scalar_select 0, %s16, %s14
  $region1: #{tpu_custom_call.1} parent=0
    #allocation4 [shape = 'u8[16384]{0}', space=vmem, size = 0x4000, scoped, tag = 'input window, operand 4']
    #allocation5 [shape = 's32[2]{0}', space=sflag, size = 0x8, scoped, tag = 'scoped memory for tpu_custom_call.1']
    #allocation6 [shape = 's32[2]{0}', space=sflag, size = 0x8, scoped, tag = 'scoped memory for tpu_custom_call.1']
    #allocation7 [shape = 'u8[16384]{0}', space=vmem, size = 0x4000, scoped, tag = 'input window, operand 5']
    #allocation8 [shape = 's32[2]{0}', space=sflag, size = 0x8, scoped, tag = 'scoped memory for tpu_custom_call.1']
    #allocation9 [shape = 'u8[1024]{0}', space=vmem, size = 0x400, scoped, tag = 'input window, operand 8']
    #allocation10 [shape = 'u8[16384]{0}', space=vmem, size = 0x4000, scoped, tag = 'input window, operand 9']
    #allocation11 [shape = 's32[2]{0}', space=sflag, size = 0x8, scoped, tag = 'scoped memory for tpu_custom_call.1']
    #allocation12 [shape = 'u8[1024]{0}', space=vmem, size = 0x400, scoped, tag = 'input window, operand 10']
    #allocation13 [shape = 'u8[16384]{0}', space=vmem, size = 0x4000, scoped, tag = 'output window, operand 0, single buffered']
    %18 = vsyncpa [#allocation5], 0
    %s19 = scalar_lea.sflag [#allocation5], 1
    %20 = vsyncpa %s19, 0
    %21 = vsyncpa [#allocation8], 0
    %s22 = scalar_lea.sflag [#allocation8], 1
    %23 = vsyncpa %s22, 0
    %24 = vsyncpa [#allocation11], 0
    %s25 = scalar_lea.sflag [#allocation11], 1
    %26 = vsyncpa %s25, 0
    %27 = vsyncpa [#allocation6], 0
    loop: start=0, step=1, limit=4
    $region2: #{tpu_custom_call.1} parent=1 // loop_pre_header
      _
    $region3: #{tpu_custom_call.1} parent=1 // loop_header
      %s29 = sphi 0, %s33
      %p30 = scmp.ge.s32.totalorder %s29, 4
      %s36 = sphi 0, %s48
      %s37 = sphi 0, %s44
      %s38 = sphi 0, %s36
      %s39 = sphi 0, %s37
      %s40 = sphi 0, %s38
      %s41 = sphi 0, %s39
      %s51 = sphi 0, %s53
      %s54 = sphi 0, %s51
      %s55 = sphi 0, %s54
      %s71 = sphi 0, %s55
      %s77 = sphi 0, %s79
      %s80 = sphi 0, %s77
      %s81 = sphi 0, %s80
      %s97 = sphi 0, %s81
      %s103 = sphi 0, %s105
      %s106 = sphi 0, %s103
      %s107 = sphi 0, %s106
      %s123 = sphi 0, %s107
      %s129 = sphi 0, %s131
      %s132 = sphi 0, %s129
      %s133 = sphi 0, %s132
      %s149 = sphi 0, %s133
      %s155 = sphi 0, %s157
      %s158 = sphi 0, %s155
      %s159 = sphi 0, %s158
      %s175 = sphi 0, %s159
      %s181 = sphi 0, %s183
      %s184 = sphi 0, %s181
      %s185 = sphi 0, %s184
      %s201 = sphi 0, %s185
      %s207 = sphi 0, %s209
      %s210 = sphi 0, %s207
      %s211 = sphi 0, %s210
      %s227 = sphi 0, %s211
      %s233 = sphi 0, %s235
      %s236 = sphi 0, %s233
      %s237 = sphi 0, %s236
      %s253 = sphi 0, %s237
      %s259 = sphi 0, %s261
      %s262 = sphi 0, %s259
      %s263 = sphi 0, %s262
      %s279 = sphi 0, %s263
      %s285 = sphi 0, %s287
      %s288 = sphi 0, %s285
      %s289 = sphi 0, %s288
      %s305 = sphi 0, %s289
      %s311 = sphi 0, %s313
      %s314 = sphi 0, %s311
      %s315 = sphi 0, %s314
      %s331 = sphi 0, %s315
      %s337 = sphi 0, %s339
      %s340 = sphi 0, %s337
      %s341 = sphi 0, %s340
      %s357 = sphi 0, %s341
      %s363 = sphi 0, %s365
      %s366 = sphi 0, %s363
      %s367 = sphi 0, %s366
      %s383 = sphi 0, %s367
      %s389 = sphi 0, %s391
      %s392 = sphi 0, %s389
      %s393 = sphi 0, %s392
      %s409 = sphi 0, %s393
    $region4: #{tpu_custom_call.1} parent=1 // loop_header_branch
      %32 = sbr.rel (%p30) target = $region8
    $region5: #{tpu_custom_call.1} parent=1 // loop_body
      %s34 = ssub.s32 %s29, 1
      %s35 = ssub.s32 %s29, 2
      %s42 = sadd.s32 1, %s37
      %p43 = scmp.ge.s32.totalorder %s42, 2
      %s44 = scalar_select %p43, 0, %s42
      %s45 = sadd.s32 1, %s36
      %s46 = scalar_select %p43, %s45, %s36
      %p47 = scmp.ge.s32.totalorder %s46, 1
      %s48 = scalar_select %p47, 0, %s46
      %s49 = ssub.s32 %s36, %s48
      %p50 = scmp.eq.s32.totalorder %s49, 0
      %s52 = sadd.s32 %s51, 1
      %s53 = scalar_select %p50, %s51, %s52
      %p56 = pneg %p50
      %p57 = scmp.eq.s32.totalorder %s29, 1
      %p58 = por %p56, %p57
      %p59 = scmp.ne.s32.totalorder %s51, %s54
      %p60 = scmp.eq.s32.totalorder %s29, 0
      %p61 = por %p59, %p60
      %p62 = scmp.ne.s32.totalorder %s51, %s54
      %p63 = scmp.eq.s32.totalorder %s34, 1
      %p64 = por %p62, %p63
      %p65 = scmp.ne.s32.totalorder %s54, %s55
      %p66 = scmp.eq.s32.totalorder %s34, 0
      %p67 = por %p65, %p66
      %p68 = scmp.ne.s32.totalorder %s54, %s55
      %p69 = scmp.eq.s32.totalorder %s35, 1
      %p70 = por %p68, %p69
      %p72 = scmp.ne.s32.totalorder %s55, %s71
      %p73 = scmp.eq.s32.totalorder %s35, 0
      %p74 = por %p72, %p73
      %s75 = ssub.s32 %s37, %s44
      %p76 = scmp.eq.s32.totalorder %s75, 0
      %s78 = sadd.s32 %s77, 1
      %s79 = scalar_select %p76, %s77, %s78
      %p82 = pneg %p76
      %p83 = scmp.eq.s32.totalorder %s29, 1
      %p84 = por %p82, %p83
      %p85 = scmp.ne.s32.totalorder %s77, %s80
      %p86 = scmp.eq.s32.totalorder %s29, 0
      %p87 = por %p85, %p86
      %p88 = scmp.ne.s32.totalorder %s77, %s80
      %p89 = scmp.eq.s32.totalorder %s34, 1
      %p90 = por %p88, %p89
      %p91 = scmp.ne.s32.totalorder %s80, %s81
      %p92 = scmp.eq.s32.totalorder %s34, 0
      %p93 = por %p91, %p92
      %p94 = scmp.ne.s32.totalorder %s80, %s81
      %p95 = scmp.eq.s32.totalorder %s35, 1
      %p96 = por %p94, %p95
      %p98 = scmp.ne.s32.totalorder %s81, %s97
      %p99 = scmp.eq.s32.totalorder %s35, 0
      %p100 = por %p98, %p99
      %s101 = ssub.s32 %s37, %s44
      %p102 = scmp.eq.s32.totalorder %s101, 0
      %s104 = sadd.s32 %s103, 1
      %s105 = scalar_select %p102, %s103, %s104
      %p108 = pneg %p102
      %p109 = scmp.eq.s32.totalorder %s29, 1
      %p110 = por %p108, %p109
      %p111 = scmp.ne.s32.totalorder %s103, %s106
      %p112 = scmp.eq.s32.totalorder %s29, 0
      %p113 = por %p111, %p112
      %p114 = scmp.ne.s32.totalorder %s103, %s106
      %p115 = scmp.eq.s32.totalorder %s34, 1
      %p116 = por %p114, %p115
      %p117 = scmp.ne.s32.totalorder %s106, %s107
      %p118 = scmp.eq.s32.totalorder %s34, 0
      %p119 = por %p117, %p118
      %p120 = scmp.ne.s32.totalorder %s106, %s107
      %p121 = scmp.eq.s32.totalorder %s35, 1
      %p122 = por %p120, %p121
      %p124 = scmp.ne.s32.totalorder %s107, %s123
      %p125 = scmp.eq.s32.totalorder %s35, 0
      %p126 = por %p124, %p125
      %s127 = ssub.s32 %s37, %s44
      %p128 = scmp.eq.s32.totalorder %s127, 0
      %s130 = sadd.s32 %s129, 1
      %s131 = scalar_select %p128, %s129, %s130
      %p134 = pneg %p128
      %p135 = scmp.eq.s32.totalorder %s29, 1
      %p136 = por %p134, %p135
      %p137 = scmp.ne.s32.totalorder %s129, %s132
      %p138 = scmp.eq.s32.totalorder %s29, 0
      %p139 = por %p137, %p138
      %p140 = scmp.ne.s32.totalorder %s129, %s132
      %p141 = scmp.eq.s32.totalorder %s34, 1
      %p142 = por %p140, %p141
      %p143 = scmp.ne.s32.totalorder %s132, %s133
      %p144 = scmp.eq.s32.totalorder %s34, 0
      %p145 = por %p143, %p144
      %p146 = scmp.ne.s32.totalorder %s132, %s133
      %p147 = scmp.eq.s32.totalorder %s35, 1
      %p148 = por %p146, %p147
      %p150 = scmp.ne.s32.totalorder %s133, %s149
      %p151 = scmp.eq.s32.totalorder %s35, 0
      %p152 = por %p150, %p151
      %s153 = ssub.s32 %s37, %s44
      %p154 = scmp.eq.s32.totalorder %s153, 0
      %s156 = sadd.s32 %s155, 1
      %s157 = scalar_select %p154, %s155, %s156
      %p160 = pneg %p154
      %p161 = scmp.eq.s32.totalorder %s29, 1
      %p162 = por %p160, %p161
      %p163 = scmp.ne.s32.totalorder %s155, %s158
      %p164 = scmp.eq.s32.totalorder %s29, 0
      %p165 = por %p163, %p164
      %p166 = scmp.ne.s32.totalorder %s155, %s158
      %p167 = scmp.eq.s32.totalorder %s34, 1
      %p168 = por %p166, %p167
      %p169 = scmp.ne.s32.totalorder %s158, %s159
      %p170 = scmp.eq.s32.totalorder %s34, 0
      %p171 = por %p169, %p170
      %p172 = scmp.ne.s32.totalorder %s158, %s159
      %p173 = scmp.eq.s32.totalorder %s35, 1
      %p174 = por %p172, %p173
      %p176 = scmp.ne.s32.totalorder %s159, %s175
      %p177 = scmp.eq.s32.totalorder %s35, 0
      %p178 = por %p176, %p177
      %s179 = ssub.s32 %s37, %s44
      %p180 = scmp.eq.s32.totalorder %s179, 0
      %s182 = sadd.s32 %s181, 1
      %s183 = scalar_select %p180, %s181, %s182
      %p186 = pneg %p180
      %p187 = scmp.eq.s32.totalorder %s29, 1
      %p188 = por %p186, %p187
      %p189 = scmp.ne.s32.totalorder %s181, %s184
      %p190 = scmp.eq.s32.totalorder %s29, 0
      %p191 = por %p189, %p190
      %p192 = scmp.ne.s32.totalorder %s181, %s184
      %p193 = scmp.eq.s32.totalorder %s34, 1
      %p194 = por %p192, %p193
      %p195 = scmp.ne.s32.totalorder %s184, %s185
      %p196 = scmp.eq.s32.totalorder %s34, 0
      %p197 = por %p195, %p196
      %p198 = scmp.ne.s32.totalorder %s184, %s185
      %p199 = scmp.eq.s32.totalorder %s35, 1
      %p200 = por %p198, %p199
      %p202 = scmp.ne.s32.totalorder %s185, %s201
      %p203 = scmp.eq.s32.totalorder %s35, 0
      %p204 = por %p202, %p203
      %s205 = ssub.s32 %s37, %s44
      %p206 = scmp.eq.s32.totalorder %s205, 0
      %s208 = sadd.s32 %s207, 1
      %s209 = scalar_select %p206, %s207, %s208
      %p212 = pneg %p206
      %p213 = scmp.eq.s32.totalorder %s29, 1
      %p214 = por %p212, %p213
      %p215 = scmp.ne.s32.totalorder %s207, %s210
      %p216 = scmp.eq.s32.totalorder %s29, 0
      %p217 = por %p215, %p216
      %p218 = scmp.ne.s32.totalorder %s207, %s210
      %p219 = scmp.eq.s32.totalorder %s34, 1
      %p220 = por %p218, %p219
      %p221 = scmp.ne.s32.totalorder %s210, %s211
      %p222 = scmp.eq.s32.totalorder %s34, 0
      %p223 = por %p221, %p222
      %p224 = scmp.ne.s32.totalorder %s210, %s211
      %p225 = scmp.eq.s32.totalorder %s35, 1
      %p226 = por %p224, %p225
      %p228 = scmp.ne.s32.totalorder %s211, %s227
      %p229 = scmp.eq.s32.totalorder %s35, 0
      %p230 = por %p228, %p229
      %s231 = ssub.s32 %s37, %s44
      %p232 = scmp.eq.s32.totalorder %s231, 0
      %s234 = sadd.s32 %s233, 1
      %s235 = scalar_select %p232, %s233, %s234
      %p238 = pneg %p232
      %p239 = scmp.eq.s32.totalorder %s29, 1
      %p240 = por %p238, %p239
      %p241 = scmp.ne.s32.totalorder %s233, %s236
      %p242 = scmp.eq.s32.totalorder %s29, 0
      %p243 = por %p241, %p242
      %p244 = scmp.ne.s32.totalorder %s233, %s236
      %p245 = scmp.eq.s32.totalorder %s34, 1
      %p246 = por %p244, %p245
      %p247 = scmp.ne.s32.totalorder %s236, %s237
      %p248 = scmp.eq.s32.totalorder %s34, 0
      %p249 = por %p247, %p248
      %p250 = scmp.ne.s32.totalorder %s236, %s237
      %p251 = scmp.eq.s32.totalorder %s35, 1
      %p252 = por %p250, %p251
      %p254 = scmp.ne.s32.totalorder %s237, %s253
      %p255 = scmp.eq.s32.totalorder %s35, 0
      %p256 = por %p254, %p255
      %s257 = ssub.s32 %s37, %s44
      %p258 = scmp.eq.s32.totalorder %s257, 0
      %s260 = sadd.s32 %s259, 1
      %s261 = scalar_select %p258, %s259, %s260
      %p264 = pneg %p258
      %p265 = scmp.eq.s32.totalorder %s29, 1
      %p266 = por %p264, %p265
      %p267 = scmp.ne.s32.totalorder %s259, %s262
      %p268 = scmp.eq.s32.totalorder %s29, 0
      %p269 = por %p267, %p268
      %p270 = scmp.ne.s32.totalorder %s259, %s262
      %p271 = scmp.eq.s32.totalorder %s34, 1
      %p272 = por %p270, %p271
      %p273 = scmp.ne.s32.totalorder %s262, %s263
      %p274 = scmp.eq.s32.totalorder %s34, 0
      %p275 = por %p273, %p274
      %p276 = scmp.ne.s32.totalorder %s262, %s263
      %p277 = scmp.eq.s32.totalorder %s35, 1
      %p278 = por %p276, %p277
      %p280 = scmp.ne.s32.totalorder %s263, %s279
      %p281 = scmp.eq.s32.totalorder %s35, 0
      %p282 = por %p280, %p281
      %s283 = ssub.s32 %s37, %s44
      %p284 = scmp.eq.s32.totalorder %s283, 0
      %s286 = sadd.s32 %s285, 1
      %s287 = scalar_select %p284, %s285, %s286
      %p290 = pneg %p284
      %p291 = scmp.eq.s32.totalorder %s29, 1
      %p292 = por %p290, %p291
      %p293 = scmp.ne.s32.totalorder %s285, %s288
      %p294 = scmp.eq.s32.totalorder %s29, 0
      %p295 = por %p293, %p294
      %p296 = scmp.ne.s32.totalorder %s285, %s288
      %p297 = scmp.eq.s32.totalorder %s34, 1
      %p298 = por %p296, %p297
      %p299 = scmp.ne.s32.totalorder %s288, %s289
      %p300 = scmp.eq.s32.totalorder %s34, 0
      %p301 = por %p299, %p300
      %p302 = scmp.ne.s32.totalorder %s288, %s289
      %p303 = scmp.eq.s32.totalorder %s35, 1
      %p304 = por %p302, %p303
      %p306 = scmp.ne.s32.totalorder %s289, %s305
      %p307 = scmp.eq.s32.totalorder %s35, 0
      %p308 = por %p306, %p307
      %s309 = ssub.s32 %s37, %s44
      %p310 = scmp.eq.s32.totalorder %s309, 0
      %s312 = sadd.s32 %s311, 1
      %s313 = scalar_select %p310, %s311, %s312
      %p316 = pneg %p310
      %p317 = scmp.eq.s32.totalorder %s29, 1
      %p318 = por %p316, %p317
      %p319 = scmp.ne.s32.totalorder %s311, %s314
      %p320 = scmp.eq.s32.totalorder %s29, 0
      %p321 = por %p319, %p320
      %p322 = scmp.ne.s32.totalorder %s311, %s314
      %p323 = scmp.eq.s32.totalorder %s34, 1
      %p324 = por %p322, %p323
      %p325 = scmp.ne.s32.totalorder %s314, %s315
      %p326 = scmp.eq.s32.totalorder %s34, 0
      %p327 = por %p325, %p326
      %p328 = scmp.ne.s32.totalorder %s314, %s315
      %p329 = scmp.eq.s32.totalorder %s35, 1
      %p330 = por %p328, %p329
      %p332 = scmp.ne.s32.totalorder %s315, %s331
      %p333 = scmp.eq.s32.totalorder %s35, 0
      %p334 = por %p332, %p333
      %s335 = ssub.s32 %s37, %s44
      %p336 = scmp.eq.s32.totalorder %s335, 0
      %s338 = sadd.s32 %s337, 1
      %s339 = scalar_select %p336, %s337, %s338
      %p342 = pneg %p336
      %p343 = scmp.eq.s32.totalorder %s29, 1
      %p344 = por %p342, %p343
      %p345 = scmp.ne.s32.totalorder %s337, %s340
      %p346 = scmp.eq.s32.totalorder %s29, 0
      %p347 = por %p345, %p346
      %p348 = scmp.ne.s32.totalorder %s337, %s340
      %p349 = scmp.eq.s32.totalorder %s34, 1
      %p350 = por %p348, %p349
      %p351 = scmp.ne.s32.totalorder %s340, %s341
      %p352 = scmp.eq.s32.totalorder %s34, 0
      %p353 = por %p351, %p352
      %p354 = scmp.ne.s32.totalorder %s340, %s341
      %p355 = scmp.eq.s32.totalorder %s35, 1
      %p356 = por %p354, %p355
      %p358 = scmp.ne.s32.totalorder %s341, %s357
      %p359 = scmp.eq.s32.totalorder %s35, 0
      %p360 = por %p358, %p359
      %s361 = ssub.s32 %s37, %s44
      %p362 = scmp.eq.s32.totalorder %s361, 0
      %s364 = sadd.s32 %s363, 1
      %s365 = scalar_select %p362, %s363, %s364
      %p368 = pneg %p362
      %p369 = scmp.eq.s32.totalorder %s29, 1
      %p370 = por %p368, %p369
      %p371 = scmp.ne.s32.totalorder %s363, %s366
      %p372 = scmp.eq.s32.totalorder %s29, 0
      %p373 = por %p371, %p372
      %p374 = scmp.ne.s32.totalorder %s363, %s366
      %p375 = scmp.eq.s32.totalorder %s34, 1
      %p376 = por %p374, %p375
      %p377 = scmp.ne.s32.totalorder %s366, %s367
      %p378 = scmp.eq.s32.totalorder %s34, 0
      %p379 = por %p377, %p378
      %p380 = scmp.ne.s32.totalorder %s366, %s367
      %p381 = scmp.eq.s32.totalorder %s35, 1
      %p382 = por %p380, %p381
      %p384 = scmp.ne.s32.totalorder %s367, %s383
      %p385 = scmp.eq.s32.totalorder %s35, 0
      %p386 = por %p384, %p385
      %s387 = ssub.s32 %s36, %s48
      %p388 = scmp.eq.s32.totalorder %s387, 0
      %s390 = sadd.s32 %s389, 1
      %s391 = scalar_select %p388, %s389, %s390
      %p394 = pneg %p388
      %p395 = scmp.eq.s32.totalorder %s29, 1
      %p396 = por %p394, %p395
      %p397 = scmp.ne.s32.totalorder %s389, %s392
      %p398 = scmp.eq.s32.totalorder %s29, 0
      %p399 = por %p397, %p398
      %p400 = scmp.ne.s32.totalorder %s389, %s392
      %p401 = scmp.eq.s32.totalorder %s34, 1
      %p402 = por %p400, %p401
      %p403 = scmp.ne.s32.totalorder %s392, %s393
      %p404 = scmp.eq.s32.totalorder %s34, 0
      %p405 = por %p403, %p404
      %p406 = scmp.ne.s32.totalorder %s392, %s393
      %p407 = scmp.eq.s32.totalorder %s35, 1
      %p408 = por %p406, %p407
      %p410 = scmp.ne.s32.totalorder %s393, %s409
      %p411 = scmp.eq.s32.totalorder %s35, 0
      %p412 = por %p410, %p411
      %p413 = scmp.le.s32.totalorder 1, %s29
      %p414 = scmp.lt.s32.totalorder %s29, 3
      %p415 = pnand %p413, %p414
      %p416 = pneg %p415
      // Predicated region
      $region9: #{tpu_custom_call.1} parent=5 // pred_check
        _
      $region10: #{tpu_custom_call.1} parent=5 // pred_check_branch
        %418 = sbr.rel (%p415) target = $region12
      $region11: #{tpu_custom_call.1} parent=5 // pred_region
        %s419 = ssub.s32 %s29, 1
        // Predicated region
        $region13: #{tpu_custom_call.1} parent=11 // pred_check
          %p420 = pneg %p67
        $region14: #{tpu_custom_call.1} parent=11 // pred_check_branch
          %422 = sbr.rel (%p420) target = $region16
        $region15: #{tpu_custom_call.1} parent=11 // pred_region
          %s423 = smul.u32 2, %s38
          %p424 = scmp.lt.s32.totalorder %s423, 1
          %s425 = scalar_select %p424, %s423, 1
          %s426 = smul.addr %s425, 2
          %s427 = smul.addr %s426, 8
          %s428 = scalar_lea.vmem %s0, %s427
          %s429 = smul.u32 2, %s38
        $region16: #{tpu_custom_call.1} parent=11 // pred_fallthru
          _
      $region12: #{tpu_custom_call.1} parent=5 // pred_fallthru
        _
      %p430 = scmp.lt.s32.totalorder %s29, 2
      // Predicated region
      $region17: #{tpu_custom_call.1} parent=5 // pred_check
        %p431 = pneg %p430
      $region18: #{tpu_custom_call.1} parent=5 // pred_check_branch
        %433 = sbr.rel (%p431) target = $region20
      $region19: #{tpu_custom_call.1} parent=5 // pred_region
        // Predicated region
        $region21: #{tpu_custom_call.1} parent=19 // pred_check
          %p434 = pneg %p87
        $region22: #{tpu_custom_call.1} parent=19 // pred_check_branch
          %436 = sbr.rel (%p434) target = $region24
        $region23: #{tpu_custom_call.1} parent=19 // pred_region
          %p437 = scmp.lt.s32.totalorder %s37, 1
          %s438 = scalar_select %p437, %s37, 1
          %s439 = smul.addr %s438, 8
          %s440 = smul.addr %s439, 8
          %s441 = scalar_lea.vmem %s1, %s440
        $region24: #{tpu_custom_call.1} parent=19 // pred_fallthru
          _
        // Predicated region
        $region25: #{tpu_custom_call.1} parent=19 // pred_check
          %p442 = pneg %p113
        $region26: #{tpu_custom_call.1} parent=19 // pred_check_branch
          %444 = sbr.rel (%p442) target = $region28
        $region27: #{tpu_custom_call.1} parent=19 // pred_region
          %p445 = scmp.lt.s32.totalorder %s37, 1
          %s446 = scalar_select %p445, %s37, 1
          %s447 = scalar_lea.vmem %s2, %s446
        $region28: #{tpu_custom_call.1} parent=19 // pred_fallthru
          _
        // Predicated region
        $region29: #{tpu_custom_call.1} parent=19 // pred_check
          %p448 = pneg %p139
        $region30: #{tpu_custom_call.1} parent=19 // pred_check_branch
          %450 = sbr.rel (%p448) target = $region32
        $region31: #{tpu_custom_call.1} parent=19 // pred_region
          %p451 = scmp.lt.s32.totalorder %s37, 1
          %s452 = scalar_select %p451, %s37, 1
          %s453 = scalar_lea.vmem %s3, %s452
        $region32: #{tpu_custom_call.1} parent=19 // pred_fallthru
          _
        // Predicated region
        $region33: #{tpu_custom_call.1} parent=19 // pred_check
          %p454 = pneg %p165
        $region34: #{tpu_custom_call.1} parent=19 // pred_check_branch
          %456 = sbr.rel (%p454) target = $region36
        $region35: #{tpu_custom_call.1} parent=19 // pred_region
          %s457 = sand.u32 %s155, 1
          %s458 = scalar_lea.sflag [#allocation5], %s457
          %s459 = sand.u32 %s155, 1
          %s460 = smul.addr %s459, 16
          %s461 = scalar_lea.vmem [#allocation4], %s460
          %s463 = ssub.s32 256, 256
          %464 = vsyncadd %s458, %s463
          %s465 = smul.addr %s37, 4
          %s466 = smul.addr %s465, 64
          %s467 = scalar_lea.hbm %s4, %s466
          %s468 = sshll.u32 %s461, 4
          %s469 = int_to_ptr.vmem [resolvable:$true] %s468
          %474 = dma.hbm_to_vmem [thread:$0]  %s467, 256, %s469, %s458, 64, 64, 4
        $region36: #{tpu_custom_call.1} parent=19 // pred_fallthru
          _
        // Predicated region
        $region37: #{tpu_custom_call.1} parent=19 // pred_check
          %p475 = pneg %p191
        $region38: #{tpu_custom_call.1} parent=19 // pred_check_branch
          %477 = sbr.rel (%p475) target = $region40
        $region39: #{tpu_custom_call.1} parent=19 // pred_region
          %s478 = sand.u32 %s29, 1
          %s479 = scalar_lea.sflag [#allocation8], %s478
          %s480 = sand.u32 %s181, 1
          %s481 = smul.addr %s480, 16
          %s482 = scalar_lea.vmem [#allocation7], %s481
          %s484 = ssub.s32 256, 256
          %485 = vsyncadd %s479, %s484
          %s486 = smul.addr %s37, 4
          %s487 = smul.addr %s486, 64
          %s488 = scalar_lea.hbm %s5, %s487
          %s489 = sshll.u32 %s482, 4
          %s490 = int_to_ptr.vmem [resolvable:$true] %s489
          %495 = dma.hbm_to_vmem [thread:$0]  %s488, 256, %s490, %s479, 64, 64, 4
        $region40: #{tpu_custom_call.1} parent=19 // pred_fallthru
          _
        // Predicated region
        $region41: #{tpu_custom_call.1} parent=19 // pred_check
          %p496 = pneg %p217
        $region42: #{tpu_custom_call.1} parent=19 // pred_check_branch
          %498 = sbr.rel (%p496) target = $region44
        $region43: #{tpu_custom_call.1} parent=19 // pred_region
          %p499 = scmp.lt.s32.totalorder %s37, 1
          %s500 = scalar_select %p499, %s37, 1
          %s501 = scalar_lea.vmem %s6, %s500
        $region44: #{tpu_custom_call.1} parent=19 // pred_fallthru
          _
        // Predicated region
        $region45: #{tpu_custom_call.1} parent=19 // pred_check
          %p502 = pneg %p243
        $region46: #{tpu_custom_call.1} parent=19 // pred_check_branch
          %504 = sbr.rel (%p502) target = $region48
        $region47: #{tpu_custom_call.1} parent=19 // pred_region
          %p505 = scmp.lt.s32.totalorder %s37, 1
          %s506 = scalar_select %p505, %s37, 1
          %s507 = scalar_lea.vmem %s7, %s506
        $region48: #{tpu_custom_call.1} parent=19 // pred_fallthru
          _
        // Predicated region
        $region49: #{tpu_custom_call.1} parent=19 // pred_check
          %p508 = pneg %p269
        $region50: #{tpu_custom_call.1} parent=19 // pred_check_branch
          %510 = sbr.rel (%p508) target = $region52
        $region51: #{tpu_custom_call.1} parent=19 // pred_region
          %s511 = sand.u32 %s29, 1
          %s512 = scalar_lea.sflag [#allocation8], %s511
          %s513 = sand.u32 %s259, 1
          %s514 = scalar_lea.vmem [#allocation9], %s513
          %s516 = ssub.s32 16, 16
          %517 = vsyncadd %s512, %s516
          %s518 = smul.addr %s37, 16
          %s519 = scalar_lea.hbm %s8, %s518
          %s521 = sshll.u32 %s514, 4
          %s522 = int_to_ptr.vmem [resolvable:$true] %s521
          %524 = dma.hbm_to_vmem [thread:$0]  %s519, 16, %s522, %s512
        $region52: #{tpu_custom_call.1} parent=19 // pred_fallthru
          _
        // Predicated region
        $region53: #{tpu_custom_call.1} parent=19 // pred_check
          %p525 = pneg %p295
        $region54: #{tpu_custom_call.1} parent=19 // pred_check_branch
          %527 = sbr.rel (%p525) target = $region56
        $region55: #{tpu_custom_call.1} parent=19 // pred_region
          %s528 = sand.u32 %s29, 1
          %s529 = scalar_lea.sflag [#allocation11], %s528
          %s530 = sand.u32 %s285, 1
          %s531 = smul.addr %s530, 16
          %s532 = scalar_lea.vmem [#allocation10], %s531
          %s534 = ssub.s32 256, 256
          %535 = vsyncadd %s529, %s534
          %s536 = smul.addr %s37, 4
          %s537 = smul.addr %s536, 64
          %s538 = scalar_lea.hbm %s9, %s537
          %s539 = sshll.u32 %s532, 4
          %s540 = int_to_ptr.vmem [resolvable:$true] %s539
          %545 = dma.hbm_to_vmem [thread:$0]  %s538, 256, %s540, %s529, 64, 64, 4
        $region56: #{tpu_custom_call.1} parent=19 // pred_fallthru
          _
        // Predicated region
        $region57: #{tpu_custom_call.1} parent=19 // pred_check
          %p546 = pneg %p321
        $region58: #{tpu_custom_call.1} parent=19 // pred_check_branch
          %548 = sbr.rel (%p546) target = $region60
        $region59: #{tpu_custom_call.1} parent=19 // pred_region
          %s549 = sand.u32 %s29, 1
          %s550 = scalar_lea.sflag [#allocation11], %s549
          %s551 = sand.u32 %s311, 1
          %s552 = scalar_lea.vmem [#allocation12], %s551
          %s554 = ssub.s32 16, 16
          %555 = vsyncadd %s550, %s554
          %s556 = smul.addr %s37, 16
          %s557 = scalar_lea.hbm %s10, %s556
          %s559 = sshll.u32 %s552, 4
          %s560 = int_to_ptr.vmem [resolvable:$true] %s559
          %562 = dma.hbm_to_vmem [thread:$0]  %s557, 16, %s560, %s550
        $region60: #{tpu_custom_call.1} parent=19 // pred_fallthru
          _
        // Predicated region
        $region61: #{tpu_custom_call.1} parent=19 // pred_check
          %p563 = pneg %p347
        $region62: #{tpu_custom_call.1} parent=19 // pred_check_branch
          %565 = sbr.rel (%p563) target = $region64
        $region63: #{tpu_custom_call.1} parent=19 // pred_region
          %p566 = scmp.lt.s32.totalorder %s37, 1
          %s567 = scalar_select %p566, %s37, 1
          %s568 = smul.addr %s567, 16
          %s569 = smul.addr %s568, 4
          %s570 = scalar_lea.vmem %s11, %s569
        $region64: #{tpu_custom_call.1} parent=19 // pred_fallthru
          _
        // Predicated region
        $region65: #{tpu_custom_call.1} parent=19 // pred_check
          %p571 = pneg %p373
        $region66: #{tpu_custom_call.1} parent=19 // pred_check_branch
          %573 = sbr.rel (%p571) target = $region68
        $region67: #{tpu_custom_call.1} parent=19 // pred_region
          %p574 = scmp.lt.s32.totalorder %s37, 1
          %s575 = scalar_select %p574, %s37, 1
          %s576 = scalar_lea.vmem %s12, %s575
        $region68: #{tpu_custom_call.1} parent=19 // pred_fallthru
          _
      $region20: #{tpu_custom_call.1} parent=5 // pred_fallthru
        _
      %p577 = scmp.le.s32.totalorder 1, %s29
      %p578 = scmp.lt.s32.totalorder %s29, 3
      %p579 = pnand %p577, %p578
      %p580 = pneg %p579
      // Predicated region
      $region69: #{tpu_custom_call.1} parent=5 // pred_check
        _
      $region70: #{tpu_custom_call.1} parent=5 // pred_check_branch
        %582 = sbr.rel (%p579) target = $region72
      $region71: #{tpu_custom_call.1} parent=5 // pred_region
        %s583 = ssub.s32 %s29, 1
        %s584 = sand.u32 %s158, 1
        %s585 = scalar_lea.sflag [#allocation5], %s584
        %s586 = sand.u32 %s158, 1
        %s587 = smul.addr %s586, 16
        %s588 = scalar_lea.vmem [#allocation4], %s587
        // Predicated region
        $region73: #{tpu_custom_call.1} parent=71 // pred_check
          %p589 = pneg %p171
        $region74: #{tpu_custom_call.1} parent=71 // pred_check_branch
          %591 = sbr.rel (%p589) target = $region76
        $region75: #{tpu_custom_call.1} parent=71 // pred_region
          %592 = dma.done %s585, 256
        $region76: #{tpu_custom_call.1} parent=71 // pred_fallthru
          _
        %s593 = sand.u32 %s34, 1
        %s594 = scalar_lea.sflag [#allocation8], %s593
        %s595 = sand.u32 %s184, 1
        %s596 = smul.addr %s595, 16
        %s597 = scalar_lea.vmem [#allocation7], %s596
        // Predicated region
        $region77: #{tpu_custom_call.1} parent=71 // pred_check
          %p598 = pneg %p197
        $region78: #{tpu_custom_call.1} parent=71 // pred_check_branch
          %600 = sbr.rel (%p598) target = $region80
        $region79: #{tpu_custom_call.1} parent=71 // pred_region
          %601 = dma.done %s594, 256
        $region80: #{tpu_custom_call.1} parent=71 // pred_fallthru
          _
        %s602 = sand.u32 %s34, 1
        %s603 = scalar_lea.sflag [#allocation8], %s602
        %s604 = sand.u32 %s262, 1
        %s605 = scalar_lea.vmem [#allocation9], %s604
        // Predicated region
        $region81: #{tpu_custom_call.1} parent=71 // pred_check
          %p606 = pneg %p275
        $region82: #{tpu_custom_call.1} parent=71 // pred_check_branch
          %608 = sbr.rel (%p606) target = $region84
        $region83: #{tpu_custom_call.1} parent=71 // pred_region
          %609 = dma.done %s603, 16
        $region84: #{tpu_custom_call.1} parent=71 // pred_fallthru
          _
        %s610 = sand.u32 %s34, 1
        %s611 = scalar_lea.sflag [#allocation11], %s610
        %s612 = sand.u32 %s288, 1
        %s613 = smul.addr %s612, 16
        %s614 = scalar_lea.vmem [#allocation10], %s613
        // Predicated region
        $region85: #{tpu_custom_call.1} parent=71 // pred_check
          %p615 = pneg %p301
        $region86: #{tpu_custom_call.1} parent=71 // pred_check_branch
          %617 = sbr.rel (%p615) target = $region88
        $region87: #{tpu_custom_call.1} parent=71 // pred_region
          %618 = dma.done %s611, 256
        $region88: #{tpu_custom_call.1} parent=71 // pred_fallthru
          _
        %s619 = sand.u32 %s34, 1
        %s620 = scalar_lea.sflag [#allocation11], %s619
        %s621 = sand.u32 %s314, 1
        %s622 = scalar_lea.vmem [#allocation12], %s621
        // Predicated region
        $region89: #{tpu_custom_call.1} parent=71 // pred_check
          %p623 = pneg %p327
        $region90: #{tpu_custom_call.1} parent=71 // pred_check_branch
          %625 = sbr.rel (%p623) target = $region92
        $region91: #{tpu_custom_call.1} parent=71 // pred_region
          %626 = dma.done %s620, 16
        $region92: #{tpu_custom_call.1} parent=71 // pred_fallthru
          _
        %s627 = smul.u32 2, %s38
        %p628 = scmp.lt.s32.totalorder %s627, 1
        %s629 = scalar_select %p628, %s627, 1
        %s630 = smul.addr %s629, 2
        %s631 = smul.addr %s630, 8
        %s632 = scalar_lea.vmem %s0, %s631
        %p633 = pneg %p67
        %p634 = pneg %p64
        %p635 = scmp.lt.s32.totalorder %s39, 1
        %s636 = scalar_select %p635, %s39, 1
        %s637 = smul.addr %s636, 8
        %s638 = smul.addr %s637, 8
        %s639 = scalar_lea.vmem %s1, %s638
        %p640 = pneg %p93
        %p641 = pneg %p90
        %p642 = scmp.lt.s32.totalorder %s39, 1
        %s643 = scalar_select %p642, %s39, 1
        %s644 = scalar_lea.vmem %s2, %s643
        %p645 = pneg %p119
        %p646 = pneg %p116
        %p647 = scmp.lt.s32.totalorder %s39, 1
        %s648 = scalar_select %p647, %s39, 1
        %s649 = scalar_lea.vmem %s3, %s648
        %p650 = pneg %p145
        %p651 = pneg %p142
        %s652 = sand.u32 %s158, 1
        %s653 = scalar_lea.sflag [#allocation5], %s652
        %s654 = sand.u32 %s158, 1
        %s655 = smul.addr %s654, 16
        %s656 = scalar_lea.vmem [#allocation4], %s655
        %p657 = pneg %p171
        %p658 = pneg %p168
        %s659 = sand.u32 %s34, 1
        %s660 = scalar_lea.sflag [#allocation8], %s659
        %s661 = sand.u32 %s184, 1
        %s662 = smul.addr %s661, 16
        %s663 = scalar_lea.vmem [#allocation7], %s662
        %p664 = pneg %p197
        %p665 = pneg %p194
        %p666 = scmp.lt.s32.totalorder %s39, 1
        %s667 = scalar_select %p666, %s39, 1
        %s668 = scalar_lea.vmem %s6, %s667
        %p669 = pneg %p223
        %p670 = pneg %p220
        %p671 = scmp.lt.s32.totalorder %s39, 1
        %s672 = scalar_select %p671, %s39, 1
        %s673 = scalar_lea.vmem %s7, %s672
        %p674 = pneg %p249
        %p675 = pneg %p246
        %s676 = sand.u32 %s34, 1
        %s677 = scalar_lea.sflag [#allocation8], %s676
        %s678 = sand.u32 %s262, 1
        %s679 = scalar_lea.vmem [#allocation9], %s678
        %p680 = pneg %p275
        %p681 = pneg %p272
        %s682 = sand.u32 %s34, 1
        %s683 = scalar_lea.sflag [#allocation11], %s682
        %s684 = sand.u32 %s288, 1
        %s685 = smul.addr %s684, 16
        %s686 = scalar_lea.vmem [#allocation10], %s685
        %p687 = pneg %p301
        %p688 = pneg %p298
        %s689 = sand.u32 %s34, 1
        %s690 = scalar_lea.sflag [#allocation11], %s689
        %s691 = sand.u32 %s314, 1
        %s692 = scalar_lea.vmem [#allocation12], %s691
        %p693 = pneg %p327
        %p694 = pneg %p324
        %p695 = scmp.lt.s32.totalorder %s39, 1
        %s696 = scalar_select %p695, %s39, 1
        %s697 = smul.addr %s696, 16
        %s698 = smul.addr %s697, 4
        %s699 = scalar_lea.vmem %s11, %s698
        %p700 = pneg %p353
        %p701 = pneg %p350
        %p702 = scmp.lt.s32.totalorder %s39, 1
        %s703 = scalar_select %p702, %s39, 1
        %s704 = scalar_lea.vmem %s12, %s703
        %p705 = pneg %p379
        %p706 = pneg %p376
        %p707 = pneg %p405
        %p708 = pneg %p402
        %s709 = smul.u32 2, %s38
        %p710 = scmp.lt.s32.totalorder %s709, 1
        %s711 = scalar_select %p710, %s709, 1
        %s712 = smul.addr %s711, 2
        %s713 = smul.addr %s712, 8
        %s714 = scalar_lea.vmem %s0, %s713
        %s715 = smul.u32 2, %s38
        %p716 = scmp.lt.s32.totalorder %s39, 1
        %s717 = scalar_select %p716, %s39, 1
        %s718 = smul.addr %s717, 8
        %s719 = smul.addr %s718, 8
        %s720 = scalar_lea.vmem %s1, %s719
        %p721 = scmp.lt.s32.totalorder %s39, 1
        %s722 = scalar_select %p721, %s39, 1
        %s723 = scalar_lea.vmem %s2, %s722
        %p724 = scmp.lt.s32.totalorder %s39, 1
        %s725 = scalar_select %p724, %s39, 1
        %s726 = scalar_lea.vmem %s3, %s725
        %p727 = scmp.lt.s32.totalorder %s39, 1
        %s728 = scalar_select %p727, %s39, 1
        %s729 = scalar_lea.vmem %s6, %s728
        %p730 = scmp.lt.s32.totalorder %s39, 1
        %s731 = scalar_select %p730, %s39, 1
        %s732 = scalar_lea.vmem %s7, %s731
        %p733 = scmp.lt.s32.totalorder %s39, 1
        %s734 = scalar_select %p733, %s39, 1
        %s735 = smul.addr %s734, 16
        %s736 = smul.addr %s735, 4
        %s737 = scalar_lea.vmem %s11, %s736
        %p738 = scmp.lt.s32.totalorder %s39, 1
        %s739 = scalar_select %p738, %s39, 1
        %s740 = scalar_lea.vmem %s12, %s739
        %s741 = smul.u32 2, %s38
        %p743 = scmp.eq.s32.totalorder %s39, 0
        // Predicated region
        $region93: #{tpu_custom_call.1} parent=71 // pred_check
          %p744 = pneg %p743
        $region94: #{tpu_custom_call.1} parent=71 // pred_check_branch
          %746 = sbr.rel (%p744) target = $region96
        $region95: #{tpu_custom_call.1} parent=71 // pred_region
          %v747 = vld [vmem:[%s714] sm:$0xff]
          %v748 = vld [vmem:[%s714 + $0x8] sm:$0xff]
          %v749 = vld [vmem:[%s714 + $0x10] sm:$0xff]
          %v750 = vld [vmem:[%s714 + $0x18] sm:$0xff]
          %vm751 = vcmask 261120
          %752 = vst.msk [vmem:[#allocation2] sm:$0xff] %vm751, %v747
          %753 = vst.msk [vmem:[#allocation2 + $0x8] sm:$0xff] %vm751, %v748
          %754 = vst.msk [vmem:[#allocation2 + $0x10] sm:$0xff] %vm751, %v749
          %755 = vst.msk [vmem:[#allocation2 + $0x18] sm:$0xff] %vm751, %v750
        $region96: #{tpu_custom_call.1} parent=71 // pred_fallthru
          _
        %v756 = vld [vmem:[#allocation2] sm:$0xff]
        %v757 = vld [vmem:[#allocation2 + $0x8] sm:$0xff]
        %v758 = vld [vmem:[#allocation2 + $0x10] sm:$0xff]
        %v759 = vld [vmem:[#allocation2 + $0x18] sm:$0xff]
        %vm760 = vcmask 261120
        %v761 = vsel %vm760, %v756, 0.0
        %762 = vadd.xlane.f32.xlu0 %v761
        %v763 = vpop.xlane.xlu0 %762
        %v764 = vsel %vm760, %v757, 0.0
        %765 = vadd.xlane.f32.xlu0 %v764
        %v766 = vpop.xlane.xlu0 %765
        %v767 = vsel %vm760, %v758, 0.0
        %768 = vadd.xlane.f32.xlu0 %v767
        %v769 = vpop.xlane.xlu0 %768
        %v770 = vsel %vm760, %v759, 0.0
        %771 = vadd.xlane.f32.xlu0 %v770
        %v772 = vpop.xlane.xlu0 %771
        %v773 = vrcp.pop 32.0
        %v774 = vmul.f32 %v763, %v773
        %v775 = vmul.f32 %v766, %v773
        %v776 = vmul.f32 %v769, %v773
        %v777 = vmul.f32 %v772, %v773
        %v778 = vsub.f32 %v756, %v774
        %v779 = vsub.f32 %v757, %v775
        %v780 = vsub.f32 %v758, %v776
        %v781 = vsub.f32 %v759, %v777
        %v782 = vmul.f32 %v778, %v778
        %v783 = vmul.f32 %v779, %v779
        %v784 = vmul.f32 %v780, %v780
        %v785 = vmul.f32 %v781, %v781
        %v786 = vsel %vm760, %v782, 0.0
        %787 = vadd.xlane.f32.xlu0 %v786
        %v788 = vpop.xlane.xlu0 %787
        %v789 = vsel %vm760, %v783, 0.0
        %790 = vadd.xlane.f32.xlu0 %v789
        %v791 = vpop.xlane.xlu0 %790
        %v792 = vsel %vm760, %v784, 0.0
        %793 = vadd.xlane.f32.xlu0 %v792
        %v794 = vpop.xlane.xlu0 %793
        %v795 = vsel %vm760, %v785, 0.0
        %796 = vadd.xlane.f32.xlu0 %v795
        %v797 = vpop.xlane.xlu0 %796
        %v798 = vmul.f32 %v788, %v773
        %v799 = vmul.f32 %v791, %v773
        %v800 = vmul.f32 %v794, %v773
        %v801 = vmul.f32 %v797, %v773
        %v802 = vadd.f32 %v798, 1e-05
        %v803 = vadd.f32 %v799, 1e-05
        %v804 = vadd.f32 %v800, 1e-05
        %v805 = vadd.f32 %v801, 1e-05
        %v806 = vrsqrt.pop %v802
        %v807 = vrsqrt.pop %v803
        %v808 = vrsqrt.pop %v804
        %v809 = vrsqrt.pop %v805
        %v810 = vmul.f32 %v778, %v806
        %v811 = vmul.f32 %v779, %v807
        %v812 = vmul.f32 %v780, %v808
        %v813 = vmul.f32 %v781, %v809
        %v814 = vld [vmem:[%s723] sm:$0x1]
        %v816 = vlaneseq
        %v817 = vshrl.u32 %v816, 7
        %v818 = vsub.s32 0, %v817
        %v819 = vrot.slane %v814, %v818
        %v821 = vmul.f32 %v810, %v819
        %v822 = vmul.f32 %v811, %v819
        %v823 = vmul.f32 %v812, %v819
        %v824 = vmul.f32 %v813, %v819
        %v825 = vld [vmem:[%s726] sm:$0x1]
        %v827 = vlaneseq
        %v828 = vshrl.u32 %v827, 7
        %v829 = vsub.s32 0, %v828
        %v830 = vrot.slane %v825, %v829
        %v832 = vadd.f32 %v821, %v830
        %v833 = vadd.f32 %v822, %v830
        %v834 = vadd.f32 %v823, %v830
        %v835 = vadd.f32 %v824, %v830
        %v836 = vpack.c.bf16 %v833, %v832
        %v837 = vpack.c.bf16 %v835, %v834
        %v838 = vld [vmem:[%s588] sm:$0xf]
        %v839 = vld [vmem:[%s588 + $0x4] sm:$0xf]
        %v840 = vld [vmem:[%s588 + $0x8] sm:$0xf]
        %v841 = vld [vmem:[%s588 + $0xc] sm:$0xf]
        %v846 = vunpack.c.l.b16 %v838
        %v847 = vunpack.c.l.b16 %v839
        %v848 = vunpack.c.l.b16 %v840
        %v849 = vunpack.c.l.b16 %v841
        %v850 = vpack.c.b16 %v847, %v846
        %v851 = vpack.c.b16 %v849, %v848
        %v855 = vsel %vm760, %v836, 0
        %v858 = vsel %vm760, %v837, 0
        %860 = vmatprep.subr.bf16.mxu0 0
        %861 = vmatpush1.bf16.msra.mxu0 %v850
        %862 = vmatprep.subr.bf16.mxu0 0
        %863 = vmatpush1.bf16.msra.mxu0 %v851
        %864 = vmatprep.subr.bf16.mxu0 0
        %865 = vmatpush1.bf16.msra.mxu0 0
        %866 = vmatprep.subr.bf16.mxu0 0
        %867 = vmatpush1.bf16.msra.mxu0 0
        %868 = vmatprep.subr.bf16.mxu0 0
        %869 = vmatpush1.bf16.msra.mxu0 0
        %870 = vmatprep.subr.bf16.mxu0 0
        %871 = vmatpush1.bf16.msra.mxu0 0
        %872 = vmatprep.subr.bf16.mxu0 0
        %873 = vmatpush1.bf16.msra.mxu0 0
        %874 = vmatprep.subr.bf16.mxu0 0
        %875 = vmatpush1.bf16.msra.mxu0 0
        %876 = vmatprep.subr.bf16.mxu0 0
        %877 = vmatpush1.bf16.msra.mxu0 0
        %878 = vmatprep.subr.bf16.mxu0 0
        %879 = vmatpush1.bf16.msra.mxu0 0
        %880 = vmatprep.subr.bf16.mxu0 0
        %881 = vmatpush1.bf16.msra.mxu0 0
        %882 = vmatprep.subr.bf16.mxu0 0
        %883 = vmatpush1.bf16.msra.mxu0 0
        %884 = vmatprep.subr.bf16.mxu0 0
        %885 = vmatpush1.bf16.msra.mxu0 0
        %886 = vmatprep.subr.bf16.mxu0 0
        %887 = vmatpush1.bf16.msra.mxu0 0
        %888 = vmatprep.subr.bf16.mxu0 0
        %889 = vmatpush1.bf16.msra.mxu0 0
        %890 = vmatprep.subr.bf16.mxu0 0
        %891 = vmatpush1.bf16.msra.mxu0 0
        %892 = vmatprep.mubr.bf16.mxu0 0
        %893 = vmatmul.mubr.bf16.gmra.mrb[0].mxu0 %v855
        %v894 = vpop.f32.mrb[0].mxu0
        %v895 = vadd.f32 0.0, %v894
        %v896 = vpop.f32.mrb[0].mxu0
        %v897 = vpop.f32.mrb[0].mxu0
        %v898 = vadd.f32 0.0, %v897
        %v899 = vpop.f32.mrb[0].mxu0
        %900 = vmatprep.mubr.bf16.mxu0 0
        %901 = vmatmul.mubr.bf16.gmra.mrb[0].mxu0 %v858
        %v902 = vpop.f32.mrb[0].mxu0
        %v903 = vadd.f32 0.0, %v902
        %v904 = vpop.f32.mrb[0].mxu0
        %v905 = vpop.f32.mrb[0].mxu0
        %v906 = vadd.f32 0.0, %v905
        %v907 = vpop.f32.mrb[0].mxu0
        %908 = vdwg.mxu0
        %v909 = vpack.c.bf16 %v898, %v895
        %v910 = vpack.c.bf16 %v906, %v903
        %v911 = vld [vmem:[%s720] sm:$0xff]
        %v912 = vld [vmem:[%s720 + $0x8] sm:$0xff]
        %914 = vrot.lane.b32.xlu0 %v909, 96
        %v915 = vpop.permute.xlu0 %914
        %vm916 = vcmask 64512
        %v918 = vsel %vm916, %v909, 0
        %v921 = vsel %vm916, %v915, 0
        %923 = vmatprep.subr.bf16.mxu0 0
        %924 = vmatpush1.bf16.xpose.msra.mxu0 %v921
        %925 = vmatprep.subr.bf16.mxu0 0
        %926 = vmatpush1.bf16.xpose.msra.mxu0 0
        %927 = vmatprep.subr.bf16.mxu0 0
        %928 = vmatpush1.bf16.xpose.msra.mxu0 0
        %929 = vmatprep.subr.bf16.mxu0 0
        %930 = vmatpush1.bf16.xpose.msra.mxu0 0
        %931 = vmatprep.subr.bf16.mxu0 0
        %932 = vmatpush1.bf16.xpose.msra.mxu0 0
        %933 = vmatprep.subr.bf16.mxu0 0
        %934 = vmatpush1.bf16.xpose.msra.mxu0 0
        %935 = vmatprep.subr.bf16.mxu0 0
        %936 = vmatpush1.bf16.xpose.msra.mxu0 0
        %937 = vmatprep.subr.bf16.mxu0 0
        %938 = vmatpush1.bf16.xpose.msra.mxu0 0
        %939 = vmatprep.subr.bf16.mxu0 0
        %940 = vmatpush1.bf16.xpose.msra.mxu0 0
        %941 = vmatprep.subr.bf16.mxu0 0
        %942 = vmatpush1.bf16.xpose.msra.mxu0 0
        %943 = vmatprep.subr.bf16.mxu0 0
        %944 = vmatpush1.bf16.xpose.msra.mxu0 0
        %945 = vmatprep.subr.bf16.mxu0 0
        %946 = vmatpush1.bf16.xpose.msra.mxu0 0
        %947 = vmatprep.subr.bf16.mxu0 0
        %948 = vmatpush1.bf16.xpose.msra.mxu0 0
        %949 = vmatprep.subr.bf16.mxu0 0
        %950 = vmatpush1.bf16.xpose.msra.mxu0 0
        %951 = vmatprep.subr.bf16.mxu0 0
        %952 = vmatpush1.bf16.xpose.msra.mxu0 0
        %953 = vmatprep.subr.bf16.mxu0 0
        %954 = vmatpush1.bf16.xpose.msra.mxu0 0
        %955 = vmatprep.mubr.bf16.mxu0 0
        %956 = vmatmul.mubr.bf16.gmra.mrb[0].mxu0 %v918
        %v957 = vpop.f32.mrb[0].mxu0
        %v958 = vadd.f32 %v911, %v957
        %v959 = vpop.f32.mrb[0].mxu0
        %v960 = vpop.f32.mrb[0].mxu0
        %v961 = vadd.f32 %v912, %v960
        %v962 = vpop.f32.mrb[0].mxu0
        %963 = vdwg.mxu0
        %965 = vrot.lane.b32.xlu0 %v910, 96
        %v966 = vpop.permute.xlu0 %965
        %v968 = vsel %vm916, %v910, 0
        %v971 = vsel %vm916, %v966, 0
        %973 = vmatprep.subr.bf16.mxu0 0
        %974 = vmatpush1.bf16.xpose.msra.mxu0 %v971
        %975 = vmatprep.subr.bf16.mxu0 0
        %976 = vmatpush1.bf16.xpose.msra.mxu0 0
        %977 = vmatprep.subr.bf16.mxu0 0
        %978 = vmatpush1.bf16.xpose.msra.mxu0 0
        %979 = vmatprep.subr.bf16.mxu0 0
        %980 = vmatpush1.bf16.xpose.msra.mxu0 0
        %981 = vmatprep.subr.bf16.mxu0 0
        %982 = vmatpush1.bf16.xpose.msra.mxu0 0
        %983 = vmatprep.subr.bf16.mxu0 0
        %984 = vmatpush1.bf16.xpose.msra.mxu0 0
        %985 = vmatprep.subr.bf16.mxu0 0
        %986 = vmatpush1.bf16.xpose.msra.mxu0 0
        %987 = vmatprep.subr.bf16.mxu0 0
        %988 = vmatpush1.bf16.xpose.msra.mxu0 0
        %989 = vmatprep.subr.bf16.mxu0 0
        %990 = vmatpush1.bf16.xpose.msra.mxu0 0
        %991 = vmatprep.subr.bf16.mxu0 0
        %992 = vmatpush1.bf16.xpose.msra.mxu0 0
        %993 = vmatprep.subr.bf16.mxu0 0
        %994 = vmatpush1.bf16.xpose.msra.mxu0 0
        %995 = vmatprep.subr.bf16.mxu0 0
        %996 = vmatpush1.bf16.xpose.msra.mxu0 0
        %997 = vmatprep.subr.bf16.mxu0 0
        %998 = vmatpush1.bf16.xpose.msra.mxu0 0
        %999 = vmatprep.subr.bf16.mxu0 0
        %1000 = vmatpush1.bf16.xpose.msra.mxu0 0
        %1001 = vmatprep.subr.bf16.mxu0 0
        %1002 = vmatpush1.bf16.xpose.msra.mxu0 0
        %1003 = vmatprep.subr.bf16.mxu0 0
        %1004 = vmatpush1.bf16.xpose.msra.mxu0 0
        %1005 = vmatprep.mubr.bf16.mxu0 0
        %1006 = vmatmul.mubr.bf16.gmra.mrb[0].mxu0 %v968
        %v1007 = vpop.f32.mrb[0].mxu0
        %v1008 = vadd.f32 %v911, %v1007
        %v1009 = vpop.f32.mrb[0].mxu0
        %v1010 = vpop.f32.mrb[0].mxu0
        %v1011 = vadd.f32 %v912, %v1010
        %v1012 = vpop.f32.mrb[0].mxu0
        %1013 = vdwg.mxu0
        %vm1014 = vcmask 130048
        %v1015 = vsel %vm1014, %v958, -inf
        %1016 = vmax.xlane.f32.xlu0 %v1015
        %v1017 = vpop.xlane.xlu0 %1016
        %v1018 = vsel %vm1014, %v961, -inf
        %1019 = vmax.xlane.f32.xlu0 %v1018
        %v1020 = vpop.xlane.xlu0 %1019
        %v1021 = vsel %vm1014, %v1008, -inf
        %1022 = vmax.xlane.f32.xlu0 %v1021
        %v1023 = vpop.xlane.xlu0 %1022
        %v1024 = vsel %vm1014, %v1011, -inf
        %1025 = vmax.xlane.f32.xlu0 %v1024
        %v1026 = vpop.xlane.xlu0 %1025
        %v1027 = vsub.f32 %v958, %v1017
        %v1028 = vsub.f32 %v961, %v1020
        %v1029 = vsub.f32 %v1008, %v1023
        %v1030 = vsub.f32 %v1011, %v1026
        %v1031 = vmul.f32 %v1027, 1.442695
        %v1032 = vpow.pop %v1031
        %v1033 = vmul.f32 %v1028, 1.442695
        %v1034 = vpow.pop %v1033
        %v1035 = vmul.f32 %v1029, 1.442695
        %v1036 = vpow.pop %v1035
        %v1037 = vmul.f32 %v1030, 1.442695
        %v1038 = vpow.pop %v1037
        %v1039 = vsel %vm1014, %v1032, 0.0
        %1040 = vadd.xlane.f32.xlu0 %v1039
        %v1041 = vpop.xlane.xlu0 %1040
        %v1042 = vsel %vm1014, %v1034, 0.0
        %1043 = vadd.xlane.f32.xlu0 %v1042
        %v1044 = vpop.xlane.xlu0 %1043
        %v1045 = vsel %vm1014, %v1036, 0.0
        %1046 = vadd.xlane.f32.xlu0 %v1045
        %v1047 = vpop.xlane.xlu0 %1046
        %v1048 = vsel %vm1014, %v1038, 0.0
        %1049 = vadd.xlane.f32.xlu0 %v1048
        %v1050 = vpop.xlane.xlu0 %1049
        %v1051 = vrcp.pop %v1041
        %v1052 = vrcp.pop %v1044
        %v1053 = vrcp.pop %v1047
        %v1054 = vrcp.pop %v1050
        %v1055 = vmul.f32 %v1032, %v1051
        %v1056 = vmul.f32 %v1034, %v1052
        %v1057 = vmul.f32 %v1036, %v1053
        %v1058 = vmul.f32 %v1038, %v1054
        %v1059 = vpack.c.bf16 %v1056, %v1055
        %v1060 = vpack.c.bf16 %v1058, %v1057
        %1061 = vrot.lane.b32.xlu0 %v909, 64
        %v1062 = vpop.permute.xlu0 %1061
        %v1065 = vsel %vm1014, %v1059, 0
        %1067 = vmatprep.subr.bf16.mxu0 0
        %1068 = vmatpush1.bf16.msra.mxu0 %v1062
        %1069 = vmatprep.subr.bf16.mxu0 0
        %1070 = vmatpush1.bf16.msra.mxu0 0
        %1071 = vmatprep.subr.bf16.mxu0 0
        %1072 = vmatpush1.bf16.msra.mxu0 0
        %1073 = vmatprep.subr.bf16.mxu0 0
        %1074 = vmatpush1.bf16.msra.mxu0 0
        %1075 = vmatprep.subr.bf16.mxu0 0
        %1076 = vmatpush1.bf16.msra.mxu0 0
        %1077 = vmatprep.subr.bf16.mxu0 0
        %1078 = vmatpush1.bf16.msra.mxu0 0
        %1079 = vmatprep.subr.bf16.mxu0 0
        %1080 = vmatpush1.bf16.msra.mxu0 0
        %1081 = vmatprep.subr.bf16.mxu0 0
        %1082 = vmatpush1.bf16.msra.mxu0 0
        %1083 = vmatprep.subr.bf16.mxu0 0
        %1084 = vmatpush1.bf16.msra.mxu0 0
        %1085 = vmatprep.subr.bf16.mxu0 0
        %1086 = vmatpush1.bf16.msra.mxu0 0
        %1087 = vmatprep.subr.bf16.mxu0 0
        %1088 = vmatpush1.bf16.msra.mxu0 0
        %1089 = vmatprep.subr.bf16.mxu0 0
        %1090 = vmatpush1.bf16.msra.mxu0 0
        %1091 = vmatprep.subr.bf16.mxu0 0
        %1092 = vmatpush1.bf16.msra.mxu0 0
        %1093 = vmatprep.subr.bf16.mxu0 0
        %1094 = vmatpush1.bf16.msra.mxu0 0
        %1095 = vmatprep.subr.bf16.mxu0 0
        %1096 = vmatpush1.bf16.msra.mxu0 0
        %1097 = vmatprep.subr.bf16.mxu0 0
        %1098 = vmatpush1.bf16.msra.mxu0 0
        %1099 = vmatprep.mubr.bf16.mxu0 0
        %1100 = vmatmul.mubr.bf16.gmra.mrb[0].mxu0 %v1065
        %v1101 = vpop.f32.mrb[0].mxu0
        %v1102 = vadd.f32 0.0, %v1101
        %v1103 = vpop.f32.mrb[0].mxu0
        %v1104 = vpop.f32.mrb[0].mxu0
        %v1105 = vadd.f32 0.0, %v1104
        %v1106 = vpop.f32.mrb[0].mxu0
        %1107 = vdwg.mxu0
        %1108 = vrot.lane.b32.xlu0 %v910, 64
        %v1109 = vpop.permute.xlu0 %1108
        %v1112 = vsel %vm1014, %v1060, 0
        %1114 = vmatprep.subr.bf16.mxu0 0
        %1115 = vmatpush1.bf16.msra.mxu0 %v1109
        %1116 = vmatprep.subr.bf16.mxu0 0
        %1117 = vmatpush1.bf16.msra.mxu0 0
        %1118 = vmatprep.subr.bf16.mxu0 0
        %1119 = vmatpush1.bf16.msra.mxu0 0
        %1120 = vmatprep.subr.bf16.mxu0 0
        %1121 = vmatpush1.bf16.msra.mxu0 0
        %1122 = vmatprep.subr.bf16.mxu0 0
        %1123 = vmatpush1.bf16.msra.mxu0 0
        %1124 = vmatprep.subr.bf16.mxu0 0
        %1125 = vmatpush1.bf16.msra.mxu0 0
        %1126 = vmatprep.subr.bf16.mxu0 0
        %1127 = vmatpush1.bf16.msra.mxu0 0
        %1128 = vmatprep.subr.bf16.mxu0 0
        %1129 = vmatpush1.bf16.msra.mxu0 0
        %1130 = vmatprep.subr.bf16.mxu0 0
        %1131 = vmatpush1.bf16.msra.mxu0 0
        %1132 = vmatprep.subr.bf16.mxu0 0
        %1133 = vmatpush1.bf16.msra.mxu0 0
        %1134 = vmatprep.subr.bf16.mxu0 0
        %1135 = vmatpush1.bf16.msra.mxu0 0
        %1136 = vmatprep.subr.bf16.mxu0 0
        %1137 = vmatpush1.bf16.msra.mxu0 0
        %1138 = vmatprep.subr.bf16.mxu0 0
        %1139 = vmatpush1.bf16.msra.mxu0 0
        %1140 = vmatprep.subr.bf16.mxu0 0
        %1141 = vmatpush1.bf16.msra.mxu0 0
        %1142 = vmatprep.subr.bf16.mxu0 0
        %1143 = vmatpush1.bf16.msra.mxu0 0
        %1144 = vmatprep.subr.bf16.mxu0 0
        %1145 = vmatpush1.bf16.msra.mxu0 0
        %1146 = vmatprep.mubr.bf16.mxu0 0
        %1147 = vmatmul.mubr.bf16.gmra.mrb[0].mxu0 %v1112
        %v1148 = vpop.f32.mrb[0].mxu0
        %v1149 = vadd.f32 0.0, %v1148
        %v1150 = vpop.f32.mrb[0].mxu0
        %v1151 = vpop.f32.mrb[0].mxu0
        %v1152 = vadd.f32 0.0, %v1151
        %v1153 = vpop.f32.mrb[0].mxu0
        %1154 = vdwg.mxu0
        %v1155 = vpack.c.bf16 %v1105, %v1102
        %v1156 = vpack.c.bf16 %v1152, %v1149
        %1157 = vst.msk [vmem:[#allocation3] sm:$0xff] %vm916, %v1155
        %1158 = vst.msk [vmem:[#allocation3 + $0x8] sm:$0xff] %vm916, %v1156
        %s1159 = scalar_lea.vmem %s720, 16
        %v1160 = vld [vmem:[%s1159] sm:$0xff]
        %v1161 = vld [vmem:[%s1159 + $0x8] sm:$0xff]
        %1162 = vrot.lane.b32.xlu0 %v909, 120
        %v1163 = vpop.permute.xlu0 %1162
        %1164 = vrot.lane.b32.xlu0 %v909, 88
        %v1165 = vpop.permute.xlu0 %1164
        %v1167 = vsel %vm916, %v1163, 0
        %v1170 = vsel %vm916, %v1165, 0
        %1172 = vmatprep.subr.bf16.mxu0 0
        %1173 = vmatpush1.bf16.xpose.msra.mxu0 %v1170
        %1174 = vmatprep.subr.bf16.mxu0 0
        %1175 = vmatpush1.bf16.xpose.msra.mxu0 0
        %1176 = vmatprep.subr.bf16.mxu0 0
        %1177 = vmatpush1.bf16.xpose.msra.mxu0 0
        %1178 = vmatprep.subr.bf16.mxu0 0
        %1179 = vmatpush1.bf16.xpose.msra.mxu0 0
        %1180 = vmatprep.subr.bf16.mxu0 0
        %1181 = vmatpush1.bf16.xpose.msra.mxu0 0
        %1182 = vmatprep.subr.bf16.mxu0 0
        %1183 = vmatpush1.bf16.xpose.msra.mxu0 0
        %1184 = vmatprep.subr.bf16.mxu0 0
        %1185 = vmatpush1.bf16.xpose.msra.mxu0 0
        %1186 = vmatprep.subr.bf16.mxu0 0
        %1187 = vmatpush1.bf16.xpose.msra.mxu0 0
        %1188 = vmatprep.subr.bf16.mxu0 0
        %1189 = vmatpush1.bf16.xpose.msra.mxu0 0
        %1190 = vmatprep.subr.bf16.mxu0 0
        %1191 = vmatpush1.bf16.xpose.msra.mxu0 0
        %1192 = vmatprep.subr.bf16.mxu0 0
        %1193 = vmatpush1.bf16.xpose.msra.mxu0 0
        %1194 = vmatprep.subr.bf16.mxu0 0
        %1195 = vmatpush1.bf16.xpose.msra.mxu0 0
        %1196 = vmatprep.subr.bf16.mxu0 0
        %1197 = vmatpush1.bf16.xpose.msra.mxu0 0
        %1198 = vmatprep.subr.bf16.mxu0 0
        %1199 = vmatpush1.bf16.xpose.msra.mxu0 0
        %1200 = vmatprep.subr.bf16.mxu0 0
        %1201 = vmatpush1.bf16.xpose.msra.mxu0 0
        %1202 = vmatprep.subr.bf16.mxu0 0
        %1203 = vmatpush1.bf16.xpose.msra.mxu0 0
        %1204 = vmatprep.mubr.bf16.mxu0 0
        %1205 = vmatmul.mubr.bf16.gmra.mrb[0].mxu0 %v1167
        %v1206 = vpop.f32.mrb[0].mxu0
        %v1207 = vadd.f32 %v1160, %v1206
        %v1208 = vpop.f32.mrb[0].mxu0
        %v1209 = vpop.f32.mrb[0].mxu0
        %v1210 = vadd.f32 %v1161, %v1209
        %v1211 = vpop.f32.mrb[0].mxu0
        %1212 = vdwg.mxu0
        %1213 = vrot.lane.b32.xlu0 %v910, 120
        %v1214 = vpop.permute.xlu0 %1213
        %1215 = vrot.lane.b32.xlu0 %v910, 88
        %v1216 = vpop.permute.xlu0 %1215
        %v1218 = vsel %vm916, %v1214, 0
        %v1221 = vsel %vm916, %v1216, 0
        %1223 = vmatprep.subr.bf16.mxu0 0
        %1224 = vmatpush1.bf16.xpose.msra.mxu0 %v1221
        %1225 = vmatprep.subr.bf16.mxu0 0
        %1226 = vmatpush1.bf16.xpose.msra.mxu0 0
        %1227 = vmatprep.subr.bf16.mxu0 0
        %1228 = vmatpush1.bf16.xpose.msra.mxu0 0
        %1229 = vmatprep.subr.bf16.mxu0 0
        %1230 = vmatpush1.bf16.xpose.msra.mxu0 0
        %1231 = vmatprep.subr.bf16.mxu0 0
        %1232 = vmatpush1.bf16.xpose.msra.mxu0 0
        %1233 = vmatprep.subr.bf16.mxu0 0
        %1234 = vmatpush1.bf16.xpose.msra.mxu0 0
        %1235 = vmatprep.subr.bf16.mxu0 0
        %1236 = vmatpush1.bf16.xpose.msra.mxu0 0
        %1237 = vmatprep.subr.bf16.mxu0 0
        %1238 = vmatpush1.bf16.xpose.msra.mxu0 0
        %1239 = vmatprep.subr.bf16.mxu0 0
        %1240 = vmatpush1.bf16.xpose.msra.mxu0 0
        %1241 = vmatprep.subr.bf16.mxu0 0
        %1242 = vmatpush1.bf16.xpose.msra.mxu0 0
        %1243 = vmatprep.subr.bf16.mxu0 0
        %1244 = vmatpush1.bf16.xpose.msra.mxu0 0
        %1245 = vmatprep.subr.bf16.mxu0 0
        %1246 = vmatpush1.bf16.xpose.msra.mxu0 0
        %1247 = vmatprep.subr.bf16.mxu0 0
        %1248 = vmatpush1.bf16.xpose.msra.mxu0 0
        %1249 = vmatprep.subr.bf16.mxu0 0
        %1250 = vmatpush1.bf16.xpose.msra.mxu0 0
        %1251 = vmatprep.subr.bf16.mxu0 0
        %1252 = vmatpush1.bf16.xpose.msra.mxu0 0
        %1253 = vmatprep.subr.bf16.mxu0 0
        %1254 = vmatpush1.bf16.xpose.msra.mxu0 0
        %1255 = vmatprep.mubr.bf16.mxu0 0
        %1256 = vmatmul.mubr.bf16.gmra.mrb[0].mxu0 %v1218
        %v1257 = vpop.f32.mrb[0].mxu0
        %v1258 = vadd.f32 %v1160, %v1257
        %v1259 = vpop.f32.mrb[0].mxu0
        %v1260 = vpop.f32.mrb[0].mxu0
        %v1261 = vadd.f32 %v1161, %v1260
        %v1262 = vpop.f32.mrb[0].mxu0
        %1263 = vdwg.mxu0
        %v1264 = vsel %vm1014, %v1207, -inf
        %1265 = vmax.xlane.f32.xlu0 %v1264
        %v1266 = vpop.xlane.xlu0 %1265
        %v1267 = vsel %vm1014, %v1210, -inf
        %1268 = vmax.xlane.f32.xlu0 %v1267
        %v1269 = vpop.xlane.xlu0 %1268
        %v1270 = vsel %vm1014, %v1258, -inf
        %1271 = vmax.xlane.f32.xlu0 %v1270
        %v1272 = vpop.xlane.xlu0 %1271
        %v1273 = vsel %vm1014, %v1261, -inf
        %1274 = vmax.xlane.f32.xlu0 %v1273
        %v1275 = vpop.xlane.xlu0 %1274
        %v1276 = vsub.f32 %v1207, %v1266
        %v1277 = vsub.f32 %v1210, %v1269
        %v1278 = vsub.f32 %v1258, %v1272
        %v1279 = vsub.f32 %v1261, %v1275
        %v1280 = vmul.f32 %v1276, 1.442695
        %v1281 = vpow.pop %v1280
        %v1282 = vmul.f32 %v1277, 1.442695
        %v1283 = vpow.pop %v1282
        %v1284 = vmul.f32 %v1278, 1.442695
        %v1285 = vpow.pop %v1284
        %v1286 = vmul.f32 %v1279, 1.442695
        %v1287 = vpow.pop %v1286
        %v1288 = vsel %vm1014, %v1281, 0.0
        %1289 = vadd.xlane.f32.xlu0 %v1288
        %v1290 = vpop.xlane.xlu0 %1289
        %v1291 = vsel %vm1014, %v1283, 0.0
        %1292 = vadd.xlane.f32.xlu0 %v1291
        %v1293 = vpop.xlane.xlu0 %1292
        %v1294 = vsel %vm1014, %v1285, 0.0
        %1295 = vadd.xlane.f32.xlu0 %v1294
        %v1296 = vpop.xlane.xlu0 %1295
        %v1297 = vsel %vm1014, %v1287, 0.0
        %1298 = vadd.xlane.f32.xlu0 %v1297
        %v1299 = vpop.xlane.xlu0 %1298
        %v1300 = vrcp.pop %v1290
        %v1301 = vrcp.pop %v1293
        %v1302 = vrcp.pop %v1296
        %v1303 = vrcp.pop %v1299
        %v1304 = vmul.f32 %v1281, %v1300
        %v1305 = vmul.f32 %v1283, %v1301
        %v1306 = vmul.f32 %v1285, %v1302
        %v1307 = vmul.f32 %v1287, %v1303
        %v1308 = vpack.c.bf16 %v1305, %v1304
        %v1309 = vpack.c.bf16 %v1307, %v1306
        %1310 = vrot.lane.b32.xlu0 %v909, 56
        %v1311 = vpop.permute.xlu0 %1310
        %v1314 = vsel %vm1014, %v1308, 0
        %1316 = vmatprep.subr.bf16.mxu0 0
        %1317 = vmatpush1.bf16.msra.mxu0 %v1311
        %1318 = vmatprep.subr.bf16.mxu0 0
        %1319 = vmatpush1.bf16.msra.mxu0 0
        %1320 = vmatprep.subr.bf16.mxu0 0
        %1321 = vmatpush1.bf16.msra.mxu0 0
        %1322 = vmatprep.subr.bf16.mxu0 0
        %1323 = vmatpush1.bf16.msra.mxu0 0
        %1324 = vmatprep.subr.bf16.mxu0 0
        %1325 = vmatpush1.bf16.msra.mxu0 0
        %1326 = vmatprep.subr.bf16.mxu0 0
        %1327 = vmatpush1.bf16.msra.mxu0 0
        %1328 = vmatprep.subr.bf16.mxu0 0
        %1329 = vmatpush1.bf16.msra.mxu0 0
        %1330 = vmatprep.subr.bf16.mxu0 0
        %1331 = vmatpush1.bf16.msra.mxu0 0
        %1332 = vmatprep.subr.bf16.mxu0 0
        %1333 = vmatpush1.bf16.msra.mxu0 0
        %1334 = vmatprep.subr.bf16.mxu0 0
        %1335 = vmatpush1.bf16.msra.mxu0 0
        %1336 = vmatprep.subr.bf16.mxu0 0
        %1337 = vmatpush1.bf16.msra.mxu0 0
        %1338 = vmatprep.subr.bf16.mxu0 0
        %1339 = vmatpush1.bf16.msra.mxu0 0
        %1340 = vmatprep.subr.bf16.mxu0 0
        %1341 = vmatpush1.bf16.msra.mxu0 0
        %1342 = vmatprep.subr.bf16.mxu0 0
        %1343 = vmatpush1.bf16.msra.mxu0 0
        %1344 = vmatprep.subr.bf16.mxu0 0
        %1345 = vmatpush1.bf16.msra.mxu0 0
        %1346 = vmatprep.subr.bf16.mxu0 0
        %1347 = vmatpush1.bf16.msra.mxu0 0
        %1348 = vmatprep.mubr.bf16.mxu0 0
        %1349 = vmatmul.mubr.bf16.gmra.mrb[0].mxu0 %v1314
        %v1350 = vpop.f32.mrb[0].mxu0
        %v1351 = vadd.f32 0.0, %v1350
        %v1352 = vpop.f32.mrb[0].mxu0
        %v1353 = vpop.f32.mrb[0].mxu0
        %v1354 = vadd.f32 0.0, %v1353
        %v1355 = vpop.f32.mrb[0].mxu0
        %1356 = vdwg.mxu0
        %1357 = vrot.lane.b32.xlu0 %v910, 56
        %v1358 = vpop.permute.xlu0 %1357
        %v1361 = vsel %vm1014, %v1309, 0
        %1363 = vmatprep.subr.bf16.mxu0 0
        %1364 = vmatpush1.bf16.msra.mxu0 %v1358
        %1365 = vmatprep.subr.bf16.mxu0 0
        %1366 = vmatpush1.bf16.msra.mxu0 0
        %1367 = vmatprep.subr.bf16.mxu0 0
        %1368 = vmatpush1.bf16.msra.mxu0 0
        %1369 = vmatprep.subr.bf16.mxu0 0
        %1370 = vmatpush1.bf16.msra.mxu0 0
        %1371 = vmatprep.subr.bf16.mxu0 0
        %1372 = vmatpush1.bf16.msra.mxu0 0
        %1373 = vmatprep.subr.bf16.mxu0 0
        %1374 = vmatpush1.bf16.msra.mxu0 0
        %1375 = vmatprep.subr.bf16.mxu0 0
        %1376 = vmatpush1.bf16.msra.mxu0 0
        %1377 = vmatprep.subr.bf16.mxu0 0
        %1378 = vmatpush1.bf16.msra.mxu0 0
        %1379 = vmatprep.subr.bf16.mxu0 0
        %1380 = vmatpush1.bf16.msra.mxu0 0
        %1381 = vmatprep.subr.bf16.mxu0 0
        %1382 = vmatpush1.bf16.msra.mxu0 0
        %1383 = vmatprep.subr.bf16.mxu0 0
        %1384 = vmatpush1.bf16.msra.mxu0 0
        %1385 = vmatprep.subr.bf16.mxu0 0
        %1386 = vmatpush1.bf16.msra.mxu0 0
        %1387 = vmatprep.subr.bf16.mxu0 0
        %1388 = vmatpush1.bf16.msra.mxu0 0
        %1389 = vmatprep.subr.bf16.mxu0 0
        %1390 = vmatpush1.bf16.msra.mxu0 0
        %1391 = vmatprep.subr.bf16.mxu0 0
        %1392 = vmatpush1.bf16.msra.mxu0 0
        %1393 = vmatprep.subr.bf16.mxu0 0
        %1394 = vmatpush1.bf16.msra.mxu0 0
        %1395 = vmatprep.mubr.bf16.mxu0 0
        %1396 = vmatmul.mubr.bf16.gmra.mrb[0].mxu0 %v1361
        %v1397 = vpop.f32.mrb[0].mxu0
        %v1398 = vadd.f32 0.0, %v1397
        %v1399 = vpop.f32.mrb[0].mxu0
        %v1400 = vpop.f32.mrb[0].mxu0
        %v1401 = vadd.f32 0.0, %v1400
        %v1402 = vpop.f32.mrb[0].mxu0
        %1403 = vdwg.mxu0
        %v1404 = vpack.c.bf16 %v1354, %v1351
        %v1405 = vpack.c.bf16 %v1401, %v1398
        %1408 = vrot.lane.b32.xlu0 %v1404, 8
        %v1409 = vpop.permute.xlu0 %1408
        %1410 = vrot.lane.b32.xlu0 %v1405, 8
        %v1411 = vpop.permute.xlu0 %1410
        %vm1414 = vcmask 130112
        %1415 = vst.msk [vmem:[#allocation3] sm:$0xff] %vm1414, %v1409
        %1416 = vst.msk [vmem:[#allocation3 + $0x8] sm:$0xff] %vm1414, %v1411
        %s1417 = scalar_lea.vmem %s720, 32
        %v1418 = vld [vmem:[%s1417] sm:$0xff]
        %v1419 = vld [vmem:[%s1417 + $0x8] sm:$0xff]
        %1420 = vrot.lane.b32.xlu0 %v909, 112
        %v1421 = vpop.permute.xlu0 %1420
        %1422 = vrot.lane.b32.xlu0 %v909, 80
        %v1423 = vpop.permute.xlu0 %1422
        %v1425 = vsel %vm916, %v1421, 0
        %v1428 = vsel %vm916, %v1423, 0
        %1430 = vmatprep.subr.bf16.mxu0 0
        %1431 = vmatpush1.bf16.xpose.msra.mxu0 %v1428
        %1432 = vmatprep.subr.bf16.mxu0 0
        %1433 = vmatpush1.bf16.xpose.msra.mxu0 0
        %1434 = vmatprep.subr.bf16.mxu0 0
        %1435 = vmatpush1.bf16.xpose.msra.mxu0 0
        %1436 = vmatprep.subr.bf16.mxu0 0
        %1437 = vmatpush1.bf16.xpose.msra.mxu0 0
        %1438 = vmatprep.subr.bf16.mxu0 0
        %1439 = vmatpush1.bf16.xpose.msra.mxu0 0
        %1440 = vmatprep.subr.bf16.mxu0 0
        %1441 = vmatpush1.bf16.xpose.msra.mxu0 0
        %1442 = vmatprep.subr.bf16.mxu0 0
        %1443 = vmatpush1.bf16.xpose.msra.mxu0 0
        %1444 = vmatprep.subr.bf16.mxu0 0
        %1445 = vmatpush1.bf16.xpose.msra.mxu0 0
        %1446 = vmatprep.subr.bf16.mxu0 0
        %1447 = vmatpush1.bf16.xpose.msra.mxu0 0
        %1448 = vmatprep.subr.bf16.mxu0 0
        %1449 = vmatpush1.bf16.xpose.msra.mxu0 0
        %1450 = vmatprep.subr.bf16.mxu0 0
        %1451 = vmatpush1.bf16.xpose.msra.mxu0 0
        %1452 = vmatprep.subr.bf16.mxu0 0
        %1453 = vmatpush1.bf16.xpose.msra.mxu0 0
        %1454 = vmatprep.subr.bf16.mxu0 0
        %1455 = vmatpush1.bf16.xpose.msra.mxu0 0
        %1456 = vmatprep.subr.bf16.mxu0 0
        %1457 = vmatpush1.bf16.xpose.msra.mxu0 0
        %1458 = vmatprep.subr.bf16.mxu0 0
        %1459 = vmatpush1.bf16.xpose.msra.mxu0 0
        %1460 = vmatprep.subr.bf16.mxu0 0
        %1461 = vmatpush1.bf16.xpose.msra.mxu0 0
        %1462 = vmatprep.mubr.bf16.mxu0 0
        %1463 = vmatmul.mubr.bf16.gmra.mrb[0].mxu0 %v1425
        %v1464 = vpop.f32.mrb[0].mxu0
        %v1465 = vadd.f32 %v1418, %v1464
        %v1466 = vpop.f32.mrb[0].mxu0
        %v1467 = vpop.f32.mrb[0].mxu0
        %v1468 = vadd.f32 %v1419, %v1467
        %v1469 = vpop.f32.mrb[0].mxu0
        %1470 = vdwg.mxu0
        %1471 = vrot.lane.b32.xlu0 %v910, 112
        %v1472 = vpop.permute.xlu0 %1471
        %1473 = vrot.lane.b32.xlu0 %v910, 80
        %v1474 = vpop.permute.xlu0 %1473
        %v1476 = vsel %vm916, %v1472, 0
        %v1479 = vsel %vm916, %v1474, 0
        %1481 = vmatprep.subr.bf16.mxu0 0
        %1482 = vmatpush1.bf16.xpose.msra.mxu0 %v1479
        %1483 = vmatprep.subr.bf16.mxu0 0
        %1484 = vmatpush1.bf16.xpose.msra.mxu0 0
        %1485 = vmatprep.subr.bf16.mxu0 0
        %1486 = vmatpush1.bf16.xpose.msra.mxu0 0
        %1487 = vmatprep.subr.bf16.mxu0 0
        %1488 = vmatpush1.bf16.xpose.msra.mxu0 0
        %1489 = vmatprep.subr.bf16.mxu0 0
        %1490 = vmatpush1.bf16.xpose.msra.mxu0 0
        %1491 = vmatprep.subr.bf16.mxu0 0
        %1492 = vmatpush1.bf16.xpose.msra.mxu0 0
        %1493 = vmatprep.subr.bf16.mxu0 0
        %1494 = vmatpush1.bf16.xpose.msra.mxu0 0
        %1495 = vmatprep.subr.bf16.mxu0 0
        %1496 = vmatpush1.bf16.xpose.msra.mxu0 0
        %1497 = vmatprep.subr.bf16.mxu0 0
        %1498 = vmatpush1.bf16.xpose.msra.mxu0 0
        %1499 = vmatprep.subr.bf16.mxu0 0
        %1500 = vmatpush1.bf16.xpose.msra.mxu0 0
        %1501 = vmatprep.subr.bf16.mxu0 0
        %1502 = vmatpush1.bf16.xpose.msra.mxu0 0
        %1503 = vmatprep.subr.bf16.mxu0 0
        %1504 = vmatpush1.bf16.xpose.msra.mxu0 0
        %1505 = vmatprep.subr.bf16.mxu0 0
        %1506 = vmatpush1.bf16.xpose.msra.mxu0 0
        %1507 = vmatprep.subr.bf16.mxu0 0
        %1508 = vmatpush1.bf16.xpose.msra.mxu0 0
        %1509 = vmatprep.subr.bf16.mxu0 0
        %1510 = vmatpush1.bf16.xpose.msra.mxu0 0
        %1511 = vmatprep.subr.bf16.mxu0 0
        %1512 = vmatpush1.bf16.xpose.msra.mxu0 0
        %1513 = vmatprep.mubr.bf16.mxu0 0
        %1514 = vmatmul.mubr.bf16.gmra.mrb[0].mxu0 %v1476
        %v1515 = vpop.f32.mrb[0].mxu0
        %v1516 = vadd.f32 %v1418, %v1515
        %v1517 = vpop.f32.mrb[0].mxu0
        %v1518 = vpop.f32.mrb[0].mxu0
        %v1519 = vadd.f32 %v1419, %v1518
        %v1520 = vpop.f32.mrb[0].mxu0
        %1521 = vdwg.mxu0
        %v1522 = vsel %vm1014, %v1465, -inf
        %1523 = vmax.xlane.f32.xlu0 %v1522
        %v1524 = vpop.xlane.xlu0 %1523
        %v1525 = vsel %vm1014, %v1468, -inf
        %1526 = vmax.xlane.f32.xlu0 %v1525
        %v1527 = vpop.xlane.xlu0 %1526
        %v1528 = vsel %vm1014, %v1516, -inf
        %1529 = vmax.xlane.f32.xlu0 %v1528
        %v1530 = vpop.xlane.xlu0 %1529
        %v1531 = vsel %vm1014, %v1519, -inf
        %1532 = vmax.xlane.f32.xlu0 %v1531
        %v1533 = vpop.xlane.xlu0 %1532
        %v1534 = vsub.f32 %v1465, %v1524
        %v1535 = vsub.f32 %v1468, %v1527
        %v1536 = vsub.f32 %v1516, %v1530
        %v1537 = vsub.f32 %v1519, %v1533
        %v1538 = vmul.f32 %v1534, 1.442695
        %v1539 = vpow.pop %v1538
        %v1540 = vmul.f32 %v1535, 1.442695
        %v1541 = vpow.pop %v1540
        %v1542 = vmul.f32 %v1536, 1.442695
        %v1543 = vpow.pop %v1542
        %v1544 = vmul.f32 %v1537, 1.442695
        %v1545 = vpow.pop %v1544
        %v1546 = vsel %vm1014, %v1539, 0.0
        %1547 = vadd.xlane.f32.xlu0 %v1546
        %v1548 = vpop.xlane.xlu0 %1547
        %v1549 = vsel %vm1014, %v1541, 0.0
        %1550 = vadd.xlane.f32.xlu0 %v1549
        %v1551 = vpop.xlane.xlu0 %1550
        %v1552 = vsel %vm1014, %v1543, 0.0
        %1553 = vadd.xlane.f32.xlu0 %v1552
        %v1554 = vpop.xlane.xlu0 %1553
        %v1555 = vsel %vm1014, %v1545, 0.0
        %1556 = vadd.xlane.f32.xlu0 %v1555
        %v1557 = vpop.xlane.xlu0 %1556
        %v1558 = vrcp.pop %v1548
        %v1559 = vrcp.pop %v1551
        %v1560 = vrcp.pop %v1554
        %v1561 = vrcp.pop %v1557
        %v1562 = vmul.f32 %v1539, %v1558
        %v1563 = vmul.f32 %v1541, %v1559
        %v1564 = vmul.f32 %v1543, %v1560
        %v1565 = vmul.f32 %v1545, %v1561
        %v1566 = vpack.c.bf16 %v1563, %v1562
        %v1567 = vpack.c.bf16 %v1565, %v1564
        %1568 = vrot.lane.b32.xlu0 %v909, 48
        %v1569 = vpop.permute.xlu0 %1568
        %v1572 = vsel %vm1014, %v1566, 0
        %1574 = vmatprep.subr.bf16.mxu0 0
        %1575 = vmatpush1.bf16.msra.mxu0 %v1569
        %1576 = vmatprep.subr.bf16.mxu0 0
        %1577 = vmatpush1.bf16.msra.mxu0 0
        %1578 = vmatprep.subr.bf16.mxu0 0
        %1579 = vmatpush1.bf16.msra.mxu0 0
        %1580 = vmatprep.subr.bf16.mxu0 0
        %1581 = vmatpush1.bf16.msra.mxu0 0
        %1582 = vmatprep.subr.bf16.mxu0 0
        %1583 = vmatpush1.bf16.msra.mxu0 0
        %1584 = vmatprep.subr.bf16.mxu0 0
        %1585 = vmatpush1.bf16.msra.mxu0 0
        %1586 = vmatprep.subr.bf16.mxu0 0
        %1587 = vmatpush1.bf16.msra.mxu0 0
        %1588 = vmatprep.subr.bf16.mxu0 0
        %1589 = vmatpush1.bf16.msra.mxu0 0
        %1590 = vmatprep.subr.bf16.mxu0 0
        %1591 = vmatpush1.bf16.msra.mxu0 0
        %1592 = vmatprep.subr.bf16.mxu0 0
        %1593 = vmatpush1.bf16.msra.mxu0 0
        %1594 = vmatprep.subr.bf16.mxu0 0
        %1595 = vmatpush1.bf16.msra.mxu0 0
        %1596 = vmatprep.subr.bf16.mxu0 0
        %1597 = vmatpush1.bf16.msra.mxu0 0
        %1598 = vmatprep.subr.bf16.mxu0 0
        %1599 = vmatpush1.bf16.msra.mxu0 0
        %1600 = vmatprep.subr.bf16.mxu0 0
        %1601 = vmatpush1.bf16.msra.mxu0 0
        %1602 = vmatprep.subr.bf16.mxu0 0
        %1603 = vmatpush1.bf16.msra.mxu0 0
        %1604 = vmatprep.subr.bf16.mxu0 0
        %1605 = vmatpush1.bf16.msra.mxu0 0
        %1606 = vmatprep.mubr.bf16.mxu0 0
        %1607 = vmatmul.mubr.bf16.gmra.mrb[0].mxu0 %v1572
        %v1608 = vpop.f32.mrb[0].mxu0
        %v1609 = vadd.f32 0.0, %v1608
        %v1610 = vpop.f32.mrb[0].mxu0
        %v1611 = vpop.f32.mrb[0].mxu0
        %v1612 = vadd.f32 0.0, %v1611
        %v1613 = vpop.f32.mrb[0].mxu0
        %1614 = vdwg.mxu0
        %1615 = vrot.lane.b32.xlu0 %v910, 48
        %v1616 = vpop.permute.xlu0 %1615
        %v1619 = vsel %vm1014, %v1567, 0
        %1621 = vmatprep.subr.bf16.mxu0 0
        %1622 = vmatpush1.bf16.msra.mxu0 %v1616
        %1623 = vmatprep.subr.bf16.mxu0 0
        %1624 = vmatpush1.bf16.msra.mxu0 0
        %1625 = vmatprep.subr.bf16.mxu0 0
        %1626 = vmatpush1.bf16.msra.mxu0 0
        %1627 = vmatprep.subr.bf16.mxu0 0
        %1628 = vmatpush1.bf16.msra.mxu0 0
        %1629 = vmatprep.subr.bf16.mxu0 0
        %1630 = vmatpush1.bf16.msra.mxu0 0
        %1631 = vmatprep.subr.bf16.mxu0 0
        %1632 = vmatpush1.bf16.msra.mxu0 0
        %1633 = vmatprep.subr.bf16.mxu0 0
        %1634 = vmatpush1.bf16.msra.mxu0 0
        %1635 = vmatprep.subr.bf16.mxu0 0
        %1636 = vmatpush1.bf16.msra.mxu0 0
        %1637 = vmatprep.subr.bf16.mxu0 0
        %1638 = vmatpush1.bf16.msra.mxu0 0
        %1639 = vmatprep.subr.bf16.mxu0 0
        %1640 = vmatpush1.bf16.msra.mxu0 0
        %1641 = vmatprep.subr.bf16.mxu0 0
        %1642 = vmatpush1.bf16.msra.mxu0 0
        %1643 = vmatprep.subr.bf16.mxu0 0
        %1644 = vmatpush1.bf16.msra.mxu0 0
        %1645 = vmatprep.subr.bf16.mxu0 0
        %1646 = vmatpush1.bf16.msra.mxu0 0
        %1647 = vmatprep.subr.bf16.mxu0 0
        %1648 = vmatpush1.bf16.msra.mxu0 0
        %1649 = vmatprep.subr.bf16.mxu0 0
        %1650 = vmatpush1.bf16.msra.mxu0 0
        %1651 = vmatprep.subr.bf16.mxu0 0
        %1652 = vmatpush1.bf16.msra.mxu0 0
        %1653 = vmatprep.mubr.bf16.mxu0 0
        %1654 = vmatmul.mubr.bf16.gmra.mrb[0].mxu0 %v1619
        %v1655 = vpop.f32.mrb[0].mxu0
        %v1656 = vadd.f32 0.0, %v1655
        %v1657 = vpop.f32.mrb[0].mxu0
        %v1658 = vpop.f32.mrb[0].mxu0
        %v1659 = vadd.f32 0.0, %v1658
        %v1660 = vpop.f32.mrb[0].mxu0
        %1661 = vdwg.mxu0
        %v1662 = vpack.c.bf16 %v1612, %v1609
        %v1663 = vpack.c.bf16 %v1659, %v1656
        %1666 = vrot.lane.b32.xlu0 %v1662, 16
        %v1667 = vpop.permute.xlu0 %1666
        %1668 = vrot.lane.b32.xlu0 %v1663, 16
        %v1669 = vpop.permute.xlu0 %1668
        %vm1672 = vcmask 195712
        %1673 = vst.msk [vmem:[#allocation3] sm:$0xff] %vm1672, %v1667
        %1674 = vst.msk [vmem:[#allocation3 + $0x8] sm:$0xff] %vm1672, %v1669
        %s1675 = scalar_lea.vmem %s720, 48
        %v1676 = vld [vmem:[%s1675] sm:$0xff]
        %v1677 = vld [vmem:[%s1675 + $0x8] sm:$0xff]
        %1678 = vrot.lane.b32.xlu0 %v909, 104
        %v1679 = vpop.permute.xlu0 %1678
        %1680 = vrot.lane.b32.xlu0 %v909, 72
        %v1681 = vpop.permute.xlu0 %1680
        %v1683 = vsel %vm916, %v1679, 0
        %v1686 = vsel %vm916, %v1681, 0
        %1688 = vmatprep.subr.bf16.mxu0 0
        %1689 = vmatpush1.bf16.xpose.msra.mxu0 %v1686
        %1690 = vmatprep.subr.bf16.mxu0 0
        %1691 = vmatpush1.bf16.xpose.msra.mxu0 0
        %1692 = vmatprep.subr.bf16.mxu0 0
        %1693 = vmatpush1.bf16.xpose.msra.mxu0 0
        %1694 = vmatprep.subr.bf16.mxu0 0
        %1695 = vmatpush1.bf16.xpose.msra.mxu0 0
        %1696 = vmatprep.subr.bf16.mxu0 0
        %1697 = vmatpush1.bf16.xpose.msra.mxu0 0
        %1698 = vmatprep.subr.bf16.mxu0 0
        %1699 = vmatpush1.bf16.xpose.msra.mxu0 0
        %1700 = vmatprep.subr.bf16.mxu0 0
        %1701 = vmatpush1.bf16.xpose.msra.mxu0 0
        %1702 = vmatprep.subr.bf16.mxu0 0
        %1703 = vmatpush1.bf16.xpose.msra.mxu0 0
        %1704 = vmatprep.subr.bf16.mxu0 0
        %1705 = vmatpush1.bf16.xpose.msra.mxu0 0
        %1706 = vmatprep.subr.bf16.mxu0 0
        %1707 = vmatpush1.bf16.xpose.msra.mxu0 0
        %1708 = vmatprep.subr.bf16.mxu0 0
        %1709 = vmatpush1.bf16.xpose.msra.mxu0 0
        %1710 = vmatprep.subr.bf16.mxu0 0
        %1711 = vmatpush1.bf16.xpose.msra.mxu0 0
        %1712 = vmatprep.subr.bf16.mxu0 0
        %1713 = vmatpush1.bf16.xpose.msra.mxu0 0
        %1714 = vmatprep.subr.bf16.mxu0 0
        %1715 = vmatpush1.bf16.xpose.msra.mxu0 0
        %1716 = vmatprep.subr.bf16.mxu0 0
        %1717 = vmatpush1.bf16.xpose.msra.mxu0 0
        %1718 = vmatprep.subr.bf16.mxu0 0
        %1719 = vmatpush1.bf16.xpose.msra.mxu0 0
        %1720 = vmatprep.mubr.bf16.mxu0 0
        %1721 = vmatmul.mubr.bf16.gmra.mrb[0].mxu0 %v1683
        %v1722 = vpop.f32.mrb[0].mxu0
        %v1723 = vadd.f32 %v1676, %v1722
        %v1724 = vpop.f32.mrb[0].mxu0
        %v1725 = vpop.f32.mrb[0].mxu0
        %v1726 = vadd.f32 %v1677, %v1725
        %v1727 = vpop.f32.mrb[0].mxu0
        %1728 = vdwg.mxu0
        %1729 = vrot.lane.b32.xlu0 %v910, 104
        %v1730 = vpop.permute.xlu0 %1729
        %1731 = vrot.lane.b32.xlu0 %v910, 72
        %v1732 = vpop.permute.xlu0 %1731
        %v1734 = vsel %vm916, %v1730, 0
        %v1737 = vsel %vm916, %v1732, 0
        %1739 = vmatprep.subr.bf16.mxu0 0
        %1740 = vmatpush1.bf16.xpose.msra.mxu0 %v1737
        %1741 = vmatprep.subr.bf16.mxu0 0
        %1742 = vmatpush1.bf16.xpose.msra.mxu0 0
        %1743 = vmatprep.subr.bf16.mxu0 0
        %1744 = vmatpush1.bf16.xpose.msra.mxu0 0
        %1745 = vmatprep.subr.bf16.mxu0 0
        %1746 = vmatpush1.bf16.xpose.msra.mxu0 0
        %1747 = vmatprep.subr.bf16.mxu0 0
        %1748 = vmatpush1.bf16.xpose.msra.mxu0 0
        %1749 = vmatprep.subr.bf16.mxu0 0
        %1750 = vmatpush1.bf16.xpose.msra.mxu0 0
        %1751 = vmatprep.subr.bf16.mxu0 0
        %1752 = vmatpush1.bf16.xpose.msra.mxu0 0
        %1753 = vmatprep.subr.bf16.mxu0 0
        %1754 = vmatpush1.bf16.xpose.msra.mxu0 0
        %1755 = vmatprep.subr.bf16.mxu0 0
        %1756 = vmatpush1.bf16.xpose.msra.mxu0 0
        %1757 = vmatprep.subr.bf16.mxu0 0
        %1758 = vmatpush1.bf16.xpose.msra.mxu0 0
        %1759 = vmatprep.subr.bf16.mxu0 0
        %1760 = vmatpush1.bf16.xpose.msra.mxu0 0
        %1761 = vmatprep.subr.bf16.mxu0 0
        %1762 = vmatpush1.bf16.xpose.msra.mxu0 0
        %1763 = vmatprep.subr.bf16.mxu0 0
        %1764 = vmatpush1.bf16.xpose.msra.mxu0 0
        %1765 = vmatprep.subr.bf16.mxu0 0
        %1766 = vmatpush1.bf16.xpose.msra.mxu0 0
        %1767 = vmatprep.subr.bf16.mxu0 0
        %1768 = vmatpush1.bf16.xpose.msra.mxu0 0
        %1769 = vmatprep.subr.bf16.mxu0 0
        %1770 = vmatpush1.bf16.xpose.msra.mxu0 0
        %1771 = vmatprep.mubr.bf16.mxu0 0
        %1772 = vmatmul.mubr.bf16.gmra.mrb[0].mxu0 %v1734
        %v1773 = vpop.f32.mrb[0].mxu0
        %v1774 = vadd.f32 %v1676, %v1773
        %v1775 = vpop.f32.mrb[0].mxu0
        %v1776 = vpop.f32.mrb[0].mxu0
        %v1777 = vadd.f32 %v1677, %v1776
        %v1778 = vpop.f32.mrb[0].mxu0
        %1779 = vdwg.mxu0
        %v1780 = vsel %vm1014, %v1723, -inf
        %1781 = vmax.xlane.f32.xlu0 %v1780
        %v1782 = vpop.xlane.xlu0 %1781
        %v1783 = vsel %vm1014, %v1726, -inf
        %1784 = vmax.xlane.f32.xlu0 %v1783
        %v1785 = vpop.xlane.xlu0 %1784
        %v1786 = vsel %vm1014, %v1774, -inf
        %1787 = vmax.xlane.f32.xlu0 %v1786
        %v1788 = vpop.xlane.xlu0 %1787
        %v1789 = vsel %vm1014, %v1777, -inf
        %1790 = vmax.xlane.f32.xlu0 %v1789
        %v1791 = vpop.xlane.xlu0 %1790
        %v1792 = vsub.f32 %v1723, %v1782
        %v1793 = vsub.f32 %v1726, %v1785
        %v1794 = vsub.f32 %v1774, %v1788
        %v1795 = vsub.f32 %v1777, %v1791
        %v1796 = vmul.f32 %v1792, 1.442695
        %v1797 = vpow.pop %v1796
        %v1798 = vmul.f32 %v1793, 1.442695
        %v1799 = vpow.pop %v1798
        %v1800 = vmul.f32 %v1794, 1.442695
        %v1801 = vpow.pop %v1800
        %v1802 = vmul.f32 %v1795, 1.442695
        %v1803 = vpow.pop %v1802
        %v1804 = vsel %vm1014, %v1797, 0.0
        %1805 = vadd.xlane.f32.xlu0 %v1804
        %v1806 = vpop.xlane.xlu0 %1805
        %v1807 = vsel %vm1014, %v1799, 0.0
        %1808 = vadd.xlane.f32.xlu0 %v1807
        %v1809 = vpop.xlane.xlu0 %1808
        %v1810 = vsel %vm1014, %v1801, 0.0
        %1811 = vadd.xlane.f32.xlu0 %v1810
        %v1812 = vpop.xlane.xlu0 %1811
        %v1813 = vsel %vm1014, %v1803, 0.0
        %1814 = vadd.xlane.f32.xlu0 %v1813
        %v1815 = vpop.xlane.xlu0 %1814
        %v1816 = vrcp.pop %v1806
        %v1817 = vrcp.pop %v1809
        %v1818 = vrcp.pop %v1812
        %v1819 = vrcp.pop %v1815
        %v1820 = vmul.f32 %v1797, %v1816
        %v1821 = vmul.f32 %v1799, %v1817
        %v1822 = vmul.f32 %v1801, %v1818
        %v1823 = vmul.f32 %v1803, %v1819
        %v1824 = vpack.c.bf16 %v1821, %v1820
        %v1825 = vpack.c.bf16 %v1823, %v1822
        %1826 = vrot.lane.b32.xlu0 %v909, 40
        %v1827 = vpop.permute.xlu0 %1826
        %v1830 = vsel %vm1014, %v1824, 0
        %1832 = vmatprep.subr.bf16.mxu0 0
        %1833 = vmatpush1.bf16.msra.mxu0 %v1827
        %1834 = vmatprep.subr.bf16.mxu0 0
        %1835 = vmatpush1.bf16.msra.mxu0 0
        %1836 = vmatprep.subr.bf16.mxu0 0
        %1837 = vmatpush1.bf16.msra.mxu0 0
        %1838 = vmatprep.subr.bf16.mxu0 0
        %1839 = vmatpush1.bf16.msra.mxu0 0
        %1840 = vmatprep.subr.bf16.mxu0 0
        %1841 = vmatpush1.bf16.msra.mxu0 0
        %1842 = vmatprep.subr.bf16.mxu0 0
        %1843 = vmatpush1.bf16.msra.mxu0 0
        %1844 = vmatprep.subr.bf16.mxu0 0
        %1845 = vmatpush1.bf16.msra.mxu0 0
        %1846 = vmatprep.subr.bf16.mxu0 0
        %1847 = vmatpush1.bf16.msra.mxu0 0
        %1848 = vmatprep.subr.bf16.mxu0 0
        %1849 = vmatpush1.bf16.msra.mxu0 0
        %1850 = vmatprep.subr.bf16.mxu0 0
        %1851 = vmatpush1.bf16.msra.mxu0 0
        %1852 = vmatprep.subr.bf16.mxu0 0
        %1853 = vmatpush1.bf16.msra.mxu0 0
        %1854 = vmatprep.subr.bf16.mxu0 0
        %1855 = vmatpush1.bf16.msra.mxu0 0
        %1856 = vmatprep.subr.bf16.mxu0 0
        %1857 = vmatpush1.bf16.msra.mxu0 0
        %1858 = vmatprep.subr.bf16.mxu0 0
        %1859 = vmatpush1.bf16.msra.mxu0 0
        %1860 = vmatprep.subr.bf16.mxu0 0
        %1861 = vmatpush1.bf16.msra.mxu0 0
        %1862 = vmatprep.subr.bf16.mxu0 0
        %1863 = vmatpush1.bf16.msra.mxu0 0
        %1864 = vmatprep.mubr.bf16.mxu0 0
        %1865 = vmatmul.mubr.bf16.gmra.mrb[0].mxu0 %v1830
        %v1866 = vpop.f32.mrb[0].mxu0
        %v1867 = vadd.f32 0.0, %v1866
        %v1868 = vpop.f32.mrb[0].mxu0
        %v1869 = vpop.f32.mrb[0].mxu0
        %v1870 = vadd.f32 0.0, %v1869
        %v1871 = vpop.f32.mrb[0].mxu0
        %1872 = vdwg.mxu0
        %1873 = vrot.lane.b32.xlu0 %v910, 40
        %v1874 = vpop.permute.xlu0 %1873
        %v1877 = vsel %vm1014, %v1825, 0
        %1879 = vmatprep.subr.bf16.mxu0 0
        %1880 = vmatpush1.bf16.msra.mxu0 %v1874
        %1881 = vmatprep.subr.bf16.mxu0 0
        %1882 = vmatpush1.bf16.msra.mxu0 0
        %1883 = vmatprep.subr.bf16.mxu0 0
        %1884 = vmatpush1.bf16.msra.mxu0 0
        %1885 = vmatprep.subr.bf16.mxu0 0
        %1886 = vmatpush1.bf16.msra.mxu0 0
        %1887 = vmatprep.subr.bf16.mxu0 0
        %1888 = vmatpush1.bf16.msra.mxu0 0
        %1889 = vmatprep.subr.bf16.mxu0 0
        %1890 = vmatpush1.bf16.msra.mxu0 0
        %1891 = vmatprep.subr.bf16.mxu0 0
        %1892 = vmatpush1.bf16.msra.mxu0 0
        %1893 = vmatprep.subr.bf16.mxu0 0
        %1894 = vmatpush1.bf16.msra.mxu0 0
        %1895 = vmatprep.subr.bf16.mxu0 0
        %1896 = vmatpush1.bf16.msra.mxu0 0
        %1897 = vmatprep.subr.bf16.mxu0 0
        %1898 = vmatpush1.bf16.msra.mxu0 0
        %1899 = vmatprep.subr.bf16.mxu0 0
        %1900 = vmatpush1.bf16.msra.mxu0 0
        %1901 = vmatprep.subr.bf16.mxu0 0
        %1902 = vmatpush1.bf16.msra.mxu0 0
        %1903 = vmatprep.subr.bf16.mxu0 0
        %1904 = vmatpush1.bf16.msra.mxu0 0
        %1905 = vmatprep.subr.bf16.mxu0 0
        %1906 = vmatpush1.bf16.msra.mxu0 0
        %1907 = vmatprep.subr.bf16.mxu0 0
        %1908 = vmatpush1.bf16.msra.mxu0 0
        %1909 = vmatprep.subr.bf16.mxu0 0
        %1910 = vmatpush1.bf16.msra.mxu0 0
        %1911 = vmatprep.mubr.bf16.mxu0 0
        %1912 = vmatmul.mubr.bf16.gmra.mrb[0].mxu0 %v1877
        %v1913 = vpop.f32.mrb[0].mxu0
        %v1914 = vadd.f32 0.0, %v1913
        %v1915 = vpop.f32.mrb[0].mxu0
        %v1916 = vpop.f32.mrb[0].mxu0
        %v1917 = vadd.f32 0.0, %v1916
        %v1918 = vpop.f32.mrb[0].mxu0
        %1919 = vdwg.mxu0
        %v1920 = vpack.c.bf16 %v1870, %v1867
        %v1921 = vpack.c.bf16 %v1917, %v1914
        %1924 = vrot.lane.b32.xlu0 %v1920, 24
        %v1925 = vpop.permute.xlu0 %1924
        %1926 = vrot.lane.b32.xlu0 %v1921, 24
        %v1927 = vpop.permute.xlu0 %1926
        %vm1930 = vcmask 261312
        %1931 = vst.msk [vmem:[#allocation3] sm:$0xff] %vm1930, %v1925
        %1932 = vst.msk [vmem:[#allocation3 + $0x8] sm:$0xff] %vm1930, %v1927
        %v1933 = vld [vmem:[#allocation3] sm:$0xff]
        %v1934 = vld [vmem:[#allocation3 + $0x8] sm:$0xff]
        %v1935 = vld [vmem:[%s597] sm:$0xf]
        %v1936 = vld [vmem:[%s597 + $0x4] sm:$0xf]
        %v1937 = vld [vmem:[%s597 + $0x8] sm:$0xf]
        %v1938 = vld [vmem:[%s597 + $0xc] sm:$0xf]
        %v1943 = vunpack.c.l.b16 %v1935
        %v1944 = vunpack.c.l.b16 %v1936
        %v1945 = vunpack.c.l.b16 %v1937
        %v1946 = vunpack.c.l.b16 %v1938
        %v1947 = vpack.c.b16 %v1944, %v1943
        %v1948 = vpack.c.b16 %v1946, %v1945
        %v1952 = vsel %vm760, %v1933, 0
        %v1955 = vsel %vm760, %v1934, 0
        %1957 = vmatprep.subr.bf16.mxu0 0
        %1958 = vmatpush1.bf16.msra.mxu0 %v1947
        %1959 = vmatprep.subr.bf16.mxu0 0
        %1960 = vmatpush1.bf16.msra.mxu0 %v1948
        %1961 = vmatprep.subr.bf16.mxu0 0
        %1962 = vmatpush1.bf16.msra.mxu0 0
        %1963 = vmatprep.subr.bf16.mxu0 0
        %1964 = vmatpush1.bf16.msra.mxu0 0
        %1965 = vmatprep.subr.bf16.mxu0 0
        %1966 = vmatpush1.bf16.msra.mxu0 0
        %1967 = vmatprep.subr.bf16.mxu0 0
        %1968 = vmatpush1.bf16.msra.mxu0 0
        %1969 = vmatprep.subr.bf16.mxu0 0
        %1970 = vmatpush1.bf16.msra.mxu0 0
        %1971 = vmatprep.subr.bf16.mxu0 0
        %1972 = vmatpush1.bf16.msra.mxu0 0
        %1973 = vmatprep.subr.bf16.mxu0 0
        %1974 = vmatpush1.bf16.msra.mxu0 0
        %1975 = vmatprep.subr.bf16.mxu0 0
        %1976 = vmatpush1.bf16.msra.mxu0 0
        %1977 = vmatprep.subr.bf16.mxu0 0
        %1978 = vmatpush1.bf16.msra.mxu0 0
        %1979 = vmatprep.subr.bf16.mxu0 0
        %1980 = vmatpush1.bf16.msra.mxu0 0
        %1981 = vmatprep.subr.bf16.mxu0 0
        %1982 = vmatpush1.bf16.msra.mxu0 0
        %1983 = vmatprep.subr.bf16.mxu0 0
        %1984 = vmatpush1.bf16.msra.mxu0 0
        %1985 = vmatprep.subr.bf16.mxu0 0
        %1986 = vmatpush1.bf16.msra.mxu0 0
        %1987 = vmatprep.subr.bf16.mxu0 0
        %1988 = vmatpush1.bf16.msra.mxu0 0
        %1989 = vmatprep.mubr.bf16.mxu0 0
        %1990 = vmatmul.mubr.bf16.gmra.mrb[0].mxu0 %v1952
        %v1991 = vpop.f32.mrb[0].mxu0
        %v1992 = vadd.f32 0.0, %v1991
        %v1993 = vpop.f32.mrb[0].mxu0
        %v1994 = vpop.f32.mrb[0].mxu0
        %v1995 = vadd.f32 0.0, %v1994
        %v1996 = vpop.f32.mrb[0].mxu0
        %1997 = vmatprep.mubr.bf16.mxu0 0
        %1998 = vmatmul.mubr.bf16.gmra.mrb[0].mxu0 %v1955
        %v1999 = vpop.f32.mrb[0].mxu0
        %v2000 = vadd.f32 0.0, %v1999
        %v2001 = vpop.f32.mrb[0].mxu0
        %v2002 = vpop.f32.mrb[0].mxu0
        %v2003 = vadd.f32 0.0, %v2002
        %v2004 = vpop.f32.mrb[0].mxu0
        %2005 = vdwg.mxu0
        %v2006 = vadd.f32 %v756, %v1992
        %v2007 = vadd.f32 %v757, %v1995
        %v2008 = vadd.f32 %v758, %v2000
        %v2009 = vadd.f32 %v759, %v2003
        %v2010 = vld [vmem:[%s729] sm:$0x1]
        %v2012 = vlaneseq
        %v2013 = vshrl.u32 %v2012, 7
        %v2014 = vsub.s32 0, %v2013
        %v2015 = vrot.slane %v2010, %v2014
        %v2017 = vadd.f32 %v2006, %v2015
        %v2018 = vadd.f32 %v2007, %v2015
        %v2019 = vadd.f32 %v2008, %v2015
        %v2020 = vadd.f32 %v2009, %v2015
        %v2021 = vsel %vm760, %v2017, 0.0
        %2022 = vadd.xlane.f32.xlu0 %v2021
        %v2023 = vpop.xlane.xlu0 %2022
        %v2024 = vsel %vm760, %v2018, 0.0
        %2025 = vadd.xlane.f32.xlu0 %v2024
        %v2026 = vpop.xlane.xlu0 %2025
        %v2027 = vsel %vm760, %v2019, 0.0
        %2028 = vadd.xlane.f32.xlu0 %v2027
        %v2029 = vpop.xlane.xlu0 %2028
        %v2030 = vsel %vm760, %v2020, 0.0
        %2031 = vadd.xlane.f32.xlu0 %v2030
        %v2032 = vpop.xlane.xlu0 %2031
        %v2033 = vmul.f32 %v2023, %v773
        %v2034 = vmul.f32 %v2026, %v773
        %v2035 = vmul.f32 %v2029, %v773
        %v2036 = vmul.f32 %v2032, %v773
        %v2037 = vsub.f32 %v2017, %v2033
        %v2038 = vsub.f32 %v2018, %v2034
        %v2039 = vsub.f32 %v2019, %v2035
        %v2040 = vsub.f32 %v2020, %v2036
        %v2041 = vmul.f32 %v2037, %v2037
        %v2042 = vmul.f32 %v2038, %v2038
        %v2043 = vmul.f32 %v2039, %v2039
        %v2044 = vmul.f32 %v2040, %v2040
        %v2045 = vsel %vm760, %v2041, 0.0
        %2046 = vadd.xlane.f32.xlu0 %v2045
        %v2047 = vpop.xlane.xlu0 %2046
        %v2048 = vsel %vm760, %v2042, 0.0
        %2049 = vadd.xlane.f32.xlu0 %v2048
        %v2050 = vpop.xlane.xlu0 %2049
        %v2051 = vsel %vm760, %v2043, 0.0
        %2052 = vadd.xlane.f32.xlu0 %v2051
        %v2053 = vpop.xlane.xlu0 %2052
        %v2054 = vsel %vm760, %v2044, 0.0
        %2055 = vadd.xlane.f32.xlu0 %v2054
        %v2056 = vpop.xlane.xlu0 %2055
        %v2057 = vmul.f32 %v2047, %v773
        %v2058 = vmul.f32 %v2050, %v773
        %v2059 = vmul.f32 %v2053, %v773
        %v2060 = vmul.f32 %v2056, %v773
        %v2061 = vadd.f32 %v2057, 1e-05
        %v2062 = vadd.f32 %v2058, 1e-05
        %v2063 = vadd.f32 %v2059, 1e-05
        %v2064 = vadd.f32 %v2060, 1e-05
        %v2065 = vrsqrt.pop %v2061
        %v2066 = vrsqrt.pop %v2062
        %v2067 = vrsqrt.pop %v2063
        %v2068 = vrsqrt.pop %v2064
        %v2069 = vmul.f32 %v2037, %v2065
        %v2070 = vmul.f32 %v2038, %v2066
        %v2071 = vmul.f32 %v2039, %v2067
        %v2072 = vmul.f32 %v2040, %v2068
        %v2073 = vld [vmem:[%s732] sm:$0x1]
        %v2075 = vlaneseq
        %v2076 = vshrl.u32 %v2075, 7
        %v2077 = vsub.s32 0, %v2076
        %v2078 = vrot.slane %v2073, %v2077
        %v2080 = vmul.f32 %v2069, %v2078
        %v2081 = vmul.f32 %v2070, %v2078
        %v2082 = vmul.f32 %v2071, %v2078
        %v2083 = vmul.f32 %v2072, %v2078
        %v2084 = vld [vmem:[%s605] sm:$0x1]
        %v2086 = vlaneseq
        %v2087 = vshrl.u32 %v2086, 7
        %v2088 = vsub.s32 0, %v2087
        %v2089 = vrot.slane %v2084, %v2088
        %v2091 = vadd.f32 %v2080, %v2089
        %v2092 = vadd.f32 %v2081, %v2089
        %v2093 = vadd.f32 %v2082, %v2089
        %v2094 = vadd.f32 %v2083, %v2089
        %v2095 = vpack.c.bf16 %v2092, %v2091
        %v2096 = vpack.c.bf16 %v2094, %v2093
        %v2097 = vld [vmem:[%s614] sm:$0xf]
        %v2098 = vld [vmem:[%s614 + $0x4] sm:$0xf]
        %v2099 = vld [vmem:[%s614 + $0x8] sm:$0xf]
        %v2100 = vld [vmem:[%s614 + $0xc] sm:$0xf]
        %v2101 = vld [vmem:[%s622] sm:$0x1]
        %v2103 = vlaneseq
        %v2104 = vshrl.u32 %v2103, 7
        %v2105 = vsub.s32 0, %v2104
        %v2106 = vrot.slane %v2101, %v2105
        %v2112 = vunpack.c.l.b16 %v2097
        %v2113 = vunpack.c.l.b16 %v2098
        %v2114 = vunpack.c.l.b16 %v2099
        %v2115 = vunpack.c.l.b16 %v2100
        %v2116 = vpack.c.b16 %v2113, %v2112
        %v2117 = vpack.c.b16 %v2115, %v2114
        %v2121 = vsel %vm760, %v2095, 0
        %v2124 = vsel %vm760, %v2096, 0
        %2126 = vmatprep.subr.bf16.mxu0 0
        %2127 = vmatpush1.bf16.msra.mxu0 %v2116
        %2128 = vmatprep.subr.bf16.mxu0 0
        %2129 = vmatpush1.bf16.msra.mxu0 %v2117
        %2130 = vmatprep.subr.bf16.mxu0 0
        %2131 = vmatpush1.bf16.msra.mxu0 0
        %2132 = vmatprep.subr.bf16.mxu0 0
        %2133 = vmatpush1.bf16.msra.mxu0 0
        %2134 = vmatprep.subr.bf16.mxu0 0
        %2135 = vmatpush1.bf16.msra.mxu0 0
        %2136 = vmatprep.subr.bf16.mxu0 0
        %2137 = vmatpush1.bf16.msra.mxu0 0
        %2138 = vmatprep.subr.bf16.mxu0 0
        %2139 = vmatpush1.bf16.msra.mxu0 0
        %2140 = vmatprep.subr.bf16.mxu0 0
        %2141 = vmatpush1.bf16.msra.mxu0 0
        %2142 = vmatprep.subr.bf16.mxu0 0
        %2143 = vmatpush1.bf16.msra.mxu0 0
        %2144 = vmatprep.subr.bf16.mxu0 0
        %2145 = vmatpush1.bf16.msra.mxu0 0
        %2146 = vmatprep.subr.bf16.mxu0 0
        %2147 = vmatpush1.bf16.msra.mxu0 0
        %2148 = vmatprep.subr.bf16.mxu0 0
        %2149 = vmatpush1.bf16.msra.mxu0 0
        %2150 = vmatprep.subr.bf16.mxu0 0
        %2151 = vmatpush1.bf16.msra.mxu0 0
        %2152 = vmatprep.subr.bf16.mxu0 0
        %2153 = vmatpush1.bf16.msra.mxu0 0
        %2154 = vmatprep.subr.bf16.mxu0 0
        %2155 = vmatpush1.bf16.msra.mxu0 0
        %2156 = vmatprep.subr.bf16.mxu0 0
        %2157 = vmatpush1.bf16.msra.mxu0 0
        %2158 = vmatprep.mubr.bf16.mxu0 0
        %2159 = vmatmul.mubr.bf16.gmra.mrb[0].mxu0 %v2121
        %v2160 = vpop.f32.mrb[0].mxu0
        %v2161 = vadd.f32 %v2106, %v2160
        %v2162 = vpop.f32.mrb[0].mxu0
        %v2163 = vpop.f32.mrb[0].mxu0
        %v2164 = vadd.f32 %v2106, %v2163
        %v2165 = vpop.f32.mrb[0].mxu0
        %2166 = vmatprep.mubr.bf16.mxu0 0
        %2167 = vmatmul.mubr.bf16.gmra.mrb[0].mxu0 %v2124
        %v2168 = vpop.f32.mrb[0].mxu0
        %v2169 = vadd.f32 %v2106, %v2168
        %v2170 = vpop.f32.mrb[0].mxu0
        %v2171 = vpop.f32.mrb[0].mxu0
        %v2172 = vadd.f32 %v2106, %v2171
        %v2173 = vpop.f32.mrb[0].mxu0
        %2174 = vdwg.mxu0
        %v2175 = vmul.f32 %v2161, 0.5
        %v2176 = vmul.f32 %v2164, 0.5
        %v2177 = vmul.f32 %v2169, 0.5
        %v2178 = vmul.f32 %v2172, 0.5
        %v2179 = vmul.f32 %v2161, 0.70710677
        %v2180 = vmul.f32 %v2164, 0.70710677
        %v2181 = vmul.f32 %v2169, 0.70710677
        %v2182 = vmul.f32 %v2172, 0.70710677
        %v2183 = verf.f32.pop %v2179
        %v2184 = verf.f32.pop %v2180
        %v2185 = verf.f32.pop %v2181
        %v2186 = verf.f32.pop %v2182
        %v2187 = vadd.f32 %v2183, 1.0
        %v2188 = vadd.f32 %v2184, 1.0
        %v2189 = vadd.f32 %v2185, 1.0
        %v2190 = vadd.f32 %v2186, 1.0
        %v2191 = vmul.f32 %v2175, %v2187
        %v2192 = vmul.f32 %v2176, %v2188
        %v2193 = vmul.f32 %v2177, %v2189
        %v2194 = vmul.f32 %v2178, %v2190
        %v2195 = vld [vmem:[%s737] sm:$0xf]
        %v2196 = vld [vmem:[%s737 + $0x4] sm:$0xf]
        %v2197 = vld [vmem:[%s737 + $0x8] sm:$0xf]
        %v2198 = vld [vmem:[%s737 + $0xc] sm:$0xf]
        %v2199 = vld [vmem:[%s737 + $0x10] sm:$0xf]
        %v2200 = vld [vmem:[%s737 + $0x14] sm:$0xf]
        %v2201 = vld [vmem:[%s737 + $0x18] sm:$0xf]
        %v2202 = vld [vmem:[%s737 + $0x1c] sm:$0xf]
        %v2203 = vld [vmem:[%s737 + $0x20] sm:$0xf]
        %v2204 = vld [vmem:[%s737 + $0x24] sm:$0xf]
        %v2205 = vld [vmem:[%s737 + $0x28] sm:$0xf]
        %v2206 = vld [vmem:[%s737 + $0x2c] sm:$0xf]
        %v2207 = vld [vmem:[%s737 + $0x30] sm:$0xf]
        %v2208 = vld [vmem:[%s737 + $0x34] sm:$0xf]
        %v2209 = vld [vmem:[%s737 + $0x38] sm:$0xf]
        %v2210 = vld [vmem:[%s737 + $0x3c] sm:$0xf]
        %v2211 = vpack.c.bf16 %v2192, %v2191
        %v2212 = vpack.c.bf16 %v2194, %v2193
        %v2229 = vunpack.c.l.b16 %v2195
        %v2230 = vunpack.c.l.b16 %v2196
        %v2231 = vunpack.c.l.b16 %v2197
        %v2232 = vunpack.c.l.b16 %v2198
        %v2233 = vunpack.c.l.b16 %v2199
        %v2234 = vunpack.c.l.b16 %v2200
        %v2235 = vunpack.c.l.b16 %v2201
        %v2236 = vunpack.c.l.b16 %v2202
        %v2237 = vunpack.c.l.b16 %v2203
        %v2238 = vunpack.c.l.b16 %v2204
        %v2239 = vunpack.c.l.b16 %v2205
        %v2240 = vunpack.c.l.b16 %v2206
        %v2241 = vunpack.c.l.b16 %v2207
        %v2242 = vunpack.c.l.b16 %v2208
        %v2243 = vunpack.c.l.b16 %v2209
        %v2244 = vunpack.c.l.b16 %v2210
        %v2245 = vpack.c.b16 %v2230, %v2229
        %v2246 = vpack.c.b16 %v2232, %v2231
        %v2247 = vpack.c.b16 %v2234, %v2233
        %v2248 = vpack.c.b16 %v2236, %v2235
        %v2249 = vpack.c.b16 %v2238, %v2237
        %v2250 = vpack.c.b16 %v2240, %v2239
        %v2251 = vpack.c.b16 %v2242, %v2241
        %v2252 = vpack.c.b16 %v2244, %v2243
        %2261 = vmatprep.subr.bf16.mxu0 0
        %2262 = vmatpush1.bf16.msra.mxu0 %v2245
        %2263 = vmatprep.subr.bf16.mxu0 0
        %2264 = vmatpush1.bf16.msra.mxu0 %v2246
        %2265 = vmatprep.subr.bf16.mxu0 0
        %2266 = vmatpush1.bf16.msra.mxu0 %v2247
        %2267 = vmatprep.subr.bf16.mxu0 0
        %2268 = vmatpush1.bf16.msra.mxu0 %v2248
        %2269 = vmatprep.subr.bf16.mxu0 0
        %2270 = vmatpush1.bf16.msra.mxu0 %v2249
        %2271 = vmatprep.subr.bf16.mxu0 0
        %2272 = vmatpush1.bf16.msra.mxu0 %v2250
        %2273 = vmatprep.subr.bf16.mxu0 0
        %2274 = vmatpush1.bf16.msra.mxu0 %v2251
        %2275 = vmatprep.subr.bf16.mxu0 0
        %2276 = vmatpush1.bf16.msra.mxu0 %v2252
        %2277 = vmatprep.subr.bf16.mxu0 0
        %2278 = vmatpush1.bf16.msra.mxu0 0
        %2279 = vmatprep.subr.bf16.mxu0 0
        %2280 = vmatpush1.bf16.msra.mxu0 0
        %2281 = vmatprep.subr.bf16.mxu0 0
        %2282 = vmatpush1.bf16.msra.mxu0 0
        %2283 = vmatprep.subr.bf16.mxu0 0
        %2284 = vmatpush1.bf16.msra.mxu0 0
        %2285 = vmatprep.subr.bf16.mxu0 0
        %2286 = vmatpush1.bf16.msra.mxu0 0
        %2287 = vmatprep.subr.bf16.mxu0 0
        %2288 = vmatpush1.bf16.msra.mxu0 0
        %2289 = vmatprep.subr.bf16.mxu0 0
        %2290 = vmatpush1.bf16.msra.mxu0 0
        %2291 = vmatprep.subr.bf16.mxu0 0
        %2292 = vmatpush1.bf16.msra.mxu0 0
        %2293 = vmatprep.mubr.bf16.mxu0 0
        %2294 = vmatmul.mubr.bf16.gmra.mrb[0].mxu0 %v2211
        %v2295 = vpop.f32.mrb[0].mxu0
        %v2296 = vadd.f32 0.0, %v2295
        %v2297 = vpop.f32.mrb[0].mxu0
        %v2298 = vpop.f32.mrb[0].mxu0
        %v2299 = vadd.f32 0.0, %v2298
        %v2300 = vpop.f32.mrb[0].mxu0
        %2301 = vmatprep.mubr.bf16.mxu0 0
        %2302 = vmatmul.mubr.bf16.gmra.mrb[0].mxu0 %v2212
        %v2303 = vpop.f32.mrb[0].mxu0
        %v2304 = vadd.f32 0.0, %v2303
        %v2305 = vpop.f32.mrb[0].mxu0
        %v2306 = vpop.f32.mrb[0].mxu0
        %v2307 = vadd.f32 0.0, %v2306
        %v2308 = vpop.f32.mrb[0].mxu0
        %2309 = vdwg.mxu0
        %v2310 = vadd.f32 %v2017, %v2296
        %v2311 = vadd.f32 %v2018, %v2299
        %v2312 = vadd.f32 %v2019, %v2304
        %v2313 = vadd.f32 %v2020, %v2307
        %v2314 = vld [vmem:[%s740] sm:$0x1]
        %v2316 = vlaneseq
        %v2317 = vshrl.u32 %v2316, 7
        %v2318 = vsub.s32 0, %v2317
        %v2319 = vrot.slane %v2314, %v2318
        %v2321 = vadd.f32 %v2310, %v2319
        %v2322 = vadd.f32 %v2311, %v2319
        %v2323 = vadd.f32 %v2312, %v2319
        %v2324 = vadd.f32 %v2313, %v2319
        %2325 = vst.msk [vmem:[#allocation2] sm:$0xff] %vm760, %v2321
        %2326 = vst.msk [vmem:[#allocation2 + $0x8] sm:$0xff] %vm760, %v2322
        %2327 = vst.msk [vmem:[#allocation2 + $0x10] sm:$0xff] %vm760, %v2323
        %2328 = vst.msk [vmem:[#allocation2 + $0x18] sm:$0xff] %vm760, %v2324
        %p2329 = scmp.eq.s32.totalorder %s39, 1
        // Predicated region
        $region97: #{tpu_custom_call.1} parent=71 // pred_check
          %p2330 = pneg %p2329
        $region98: #{tpu_custom_call.1} parent=71 // pred_check_branch
          %2332 = sbr.rel (%p2330) target = $region100
        $region99: #{tpu_custom_call.1} parent=71 // pred_region
          %2333 = vst.msk [vmem:[#allocation13] sm:$0xff] %vm760, %v2321
          %2334 = vst.msk [vmem:[#allocation13 + $0x8] sm:$0xff] %vm760, %v2322
          %2335 = vst.msk [vmem:[#allocation13 + $0x10] sm:$0xff] %vm760, %v2323
          %2336 = vst.msk [vmem:[#allocation13 + $0x18] sm:$0xff] %vm760, %v2324
        $region100: #{tpu_custom_call.1} parent=71 // pred_fallthru
          _
        // Predicated region
        $region101: #{tpu_custom_call.1} parent=71 // pred_check
          %p2337 = pneg %p402
        $region102: #{tpu_custom_call.1} parent=71 // pred_check_branch
          %2339 = sbr.rel (%p2337) target = $region104
        $region103: #{tpu_custom_call.1} parent=71 // pred_region
          %s2340 = smul.u32 2, %s38
          %s2342 = ssub.s32 512, 512
          %2343 = vsyncadd [#allocation6], %s2342
          %s2344 = smul.addr %s2340, 2
          %s2345 = smul.addr %s2344, 128
          %s2346 = scalar_lea.hbm %s13, %s2345
          %s2347 = sshll.u32 [#allocation13], 4
          %s2348 = int_to_ptr.vmem [resolvable:$true] %s2347
          %2353 = dma.vmem_to_hbm [thread:$0]  %s2348, 512, %s2346, [#allocation6], 128, 128, 8
        $region104: #{tpu_custom_call.1} parent=71 // pred_fallthru
          _
        // Predicated region
        $region105: #{tpu_custom_call.1} parent=71 // pred_check
          %p2354 = pneg %p402
        $region106: #{tpu_custom_call.1} parent=71 // pred_check_branch
          %2356 = sbr.rel (%p2354) target = $region108
        $region107: #{tpu_custom_call.1} parent=71 // pred_region
          %2357 = dma.done [#allocation6], 512
        $region108: #{tpu_custom_call.1} parent=71 // pred_fallthru
          _
      $region72: #{tpu_custom_call.1} parent=5 // pred_fallthru
        _
      %p2358 = scmp.le.s32.totalorder 2, %s29
      // Predicated region
      $region109: #{tpu_custom_call.1} parent=5 // pred_check
        %p2359 = pneg %p2358
      $region110: #{tpu_custom_call.1} parent=5 // pred_check_branch
        %2361 = sbr.rel (%p2359) target = $region112
      $region111: #{tpu_custom_call.1} parent=5 // pred_region
        %s2362 = ssub.s32 %s29, 2
      $region112: #{tpu_custom_call.1} parent=5 // pred_fallthru
        _
    $region6: #{tpu_custom_call.1} parent=1 // loop_footer
      %s33 = sadd.s32 1, %s29
    $region7: #{tpu_custom_call.1} parent=1 // loop_footer_branch
      %28 = sbr.rel target = $region3
    $region8: #{tpu_custom_call.1} parent=1 // loop_exit
      _
    %2363 = vsyncpa [#allocation5], 1
    %s2364 = scalar_lea.sflag [#allocation5], 1
    %2365 = vsyncpa %s2364, 1
    %2366 = vsyncpa [#allocation8], 1
    %s2367 = scalar_lea.sflag [#allocation8], 1
    %2368 = vsyncpa %s2367, 1
    %2369 = vsyncpa [#allocation11], 1
    %s2370 = scalar_lea.sflag [#allocation11], 1
    %2371 = vsyncpa %s2370, 1
    %2372 = vsyncpa [#allocation6], 1
    %s2373 = scalar_lea.sflag [#allocation6], 1
    %2374 = vsyncpa %s2373, 1

</llo_original>
